<compile_context>
chip_gen: v7x
topology: tpu7x:2x2x1
jax: 0.10.0
libtpu: 0.0.40
codegen_flags: <defaults>
</compile_context>

<pallas_src>
import jax
import jax.numpy as jnp
from jax import lax
from jax.experimental import pallas as pl
from jax.experimental.pallas import tpu as pltpu


def _round_up(n: int, m: int) -> int:
    return ((n + m - 1) // m) * m


# ---------------------------------------------------------------------------
# Pallas kernel: hoisted input projection (-> VMEM scratch, time-major)
#                + unrolled LSTM recurrence + Linear epilogue.
# ---------------------------------------------------------------------------
def _lstm_agent_kernel(x_ref,      # (T, Bt, I)   f32, time-major batch tile
                       wih_ref,    # (I, 4H)      matmul dtype, gates [i,f,o,g]
                       whh_ref,    # (H, 4H)      matmul dtype, gates [i,f,o,g]
                       b_ref,      # (1, 4H)      f32, b_ih + b_hh, permuted
                       wfc_ref,    # (H, O_pad)   matmul dtype = fc.weight.T (padded)
                       bfc_ref,    # (1, O_pad)   f32 = fc.bias (padded)
                       out_ref,    # (Bt, O_pad)  f32
                       xp_ref):    # (T*Bt, 4H)   f32 VMEM scratch, time-major
    T, Bt, I = x_ref.shape
    H = whh_ref.shape[0]

    # ---- hoisted input projection: ONE big MXU matmul over all timesteps.
    # Result spilled to VMEM scratch (time-major rows t*Bt + b) instead of
    # being held in vregs across the serial loop.
    x2d = x_ref[...].reshape(T * Bt, I).astype(wih_ref.dtype)
    xp_ref[...] = (jnp.dot(x2d, wih_ref[...],
                           preferred_element_type=jnp.float32)
                   + b_ref[...])

    # ---- serial recurrence: only the unavoidable h @ Whh^T dependency left.
    def step(t, carry):
        h, c = carry
        row = pl.multiple_of(t * Bt, Bt)                 # one aligned vld
        gates = xp_ref[pl.ds(row, Bt), :] + jnp.dot(
            h.astype(whh_ref.dtype), whh_ref[...],
            preferred_element_type=jnp.float32)
        # gate order after prep permutation: [i, f, o, g]
        sig = jax.nn.sigmoid(gates[:, :3 * H])           # i/f/o: one EUP push
        i_g = sig[:, 0 * H:1 * H]
        f_g = sig[:, 1 * H:2 * H]
        o_g = sig[:, 2 * H:3 * H]
        g_g = jnp.tanh(gates[:, 3 * H:])                 # EUP push
        c = f_g * c + i_g * g_g                          # f32 state (v5e-safe)
        h = o_g * jnp.tanh(c)                            # EUP push
        return (h, c)

    h0 = jnp.zeros((Bt, H), jnp.float32)
    c0 = jnp.zeros((Bt, H), jnp.float32)
    h, _ = lax.fori_loop(0, T, step, (h0, c0), unroll=True)

    # ---- fc on the last hidden state (lane-dense padded, matmul dtype) ----
    out_ref[...] = (jnp.dot(h.astype(wfc_ref.dtype), wfc_ref[...],
                            preferred_element_type=jnp.float32)
                    + bfc_ref[...]).astype(out_ref.dtype)


# ---------------------------------------------------------------------------
# One-time parameter preprocessing (hoisted out of the per-call path).
# ---------------------------------------------------------------------------
def prepare_lstm_params(params, *, matmul_dtype=jnp.bfloat16):
    w_ih, w_hh = params["w_ih"], params["w_hh"]
    b_ih, b_hh = params["b_ih"], params["b_hh"]
    w_fc, b_fc = params["w_fc"], params["b_fc"]
    H = w_hh.shape[1]
    O = w_fc.shape[0]
    O_pad = _round_up(O, 128)

    # Regroup gates [i, f, g, o] (PyTorch) -> [i, f, o, g] so one wide sigmoid
    # covers i/f/o.  Applied consistently to w_ih, w_hh and the biases.
    perm = jnp.concatenate([jnp.arange(0, 2 * H),
                            jnp.arange(3 * H, 4 * H),
                            jnp.arange(2 * H, 3 * H)])
    wfc_t = jnp.zeros((H, O_pad), matmul_dtype).at[:, :O].set(
        jnp.transpose(w_fc).astype(matmul_dtype))
    bfc_p = jnp.zeros((1, O_pad), jnp.float32).at[:, :O].set(b_fc.reshape(1, O))
    return {
        "wih_t": jnp.transpose(w_ih[perm]).astype(matmul_dtype),   # (I, 4H)
        "whh_t": jnp.transpose(w_hh[perm]).astype(matmul_dtype),   # (H, 4H)
        "bias": (b_ih + b_hh)[perm].reshape(1, 4 * H).astype(jnp.float32),
        "wfc_t": wfc_t,                                            # (H, O_pad)
        "bfc_p": bfc_p,                                            # (1, O_pad)
    }


# ---------------------------------------------------------------------------
# Forward wrapper (jit this; `prepped` comes from prepare_lstm_params).
# ---------------------------------------------------------------------------
def lstm_agent_forward(x_nchw, prepped, *, out_size):
    """x_nchw: (B, C, T, F) float32 -> (B, out_size) float32."""
    B, C, T, F = x_nchw.shape
    I = C * F
    whh_t = prepped["whh_t"]
    H = whh_t.shape[0]
    O_pad = prepped["wfc_t"].shape[1]
    matmul_dtype = prepped["wih_t"].dtype

    # torch: x.view(B, x.size(2), -1) -- raw row-major reinterpretation
    # (channel and time interleave unless C == 1; matches the reference).
    x_btd = x_nchw.reshape(B, T, I)

    # Sublane-dense batch tile: either one tile covering the whole padded
    # batch, or 128-row tiles for large batches (valid for f32 and bf16).
    B_TILE = min(_round_up(B, 8), 128)
    # v7x VMEM budget (64 MiB physical / 32 MiB scoped): double-buffered f32
    # x block + f32 projection scratch must stay well under the scoped limit.
    while B_TILE > 8 and B_TILE * T * (2 * I * 4 + 4 * H * 4) > 24 * 1024 * 1024:
        B_TILE //= 2
    B_pad = _round_up(B, B_TILE)

    # Pad batch, go time-major (rows = t, b). One tiny fused copy under jit.
    x_p = jnp.pad(x_btd, ((0, B_pad - B), (0, 0), (0, 0)))
    x_tm = jnp.transpose(x_p, (1, 0, 2))                 # (T, B_pad, I) f32

    out_pad = pl.pallas_call(
        _lstm_agent_kernel,
        out_shape=jax.ShapeDtypeStruct((B_pad, O_pad), jnp.float32),
        grid_spec=pltpu.PrefetchScalarGridSpec(
            num_scalar_prefetch=0,
            grid=(B_pad // B_TILE,),
            in_specs=[
                pl.BlockSpec((T, B_TILE, I), lambda i: (0, i, 0)),  # x tile
                pl.BlockSpec((I, 4 * H), lambda i: (0, 0)),         # Wih^T
                pl.BlockSpec((H, 4 * H), lambda i: (0, 0)),         # Whh^T
                pl.BlockSpec((1, 4 * H), lambda i: (0, 0)),         # lstm bias
                pl.BlockSpec((H, O_pad), lambda i: (0, 0)),         # fc weight^T
                pl.BlockSpec((1, O_pad), lambda i: (0, 0)),         # fc bias
            ],
            out_specs=pl.BlockSpec((B_TILE, O_pad), lambda i: (i, 0)),
            scratch_shapes=[pltpu.VMEM((T * B_TILE, 4 * H), jnp.float32)],
        ),
        compiler_params=pltpu.CompilerParams(
            # batch tiles -> both TensorCores on v7x (no-op at grid=(1,))
            dimension_semantics=("parallel",),
            # Raise toward 64-96 MiB on v5e/v6e if tiles grow for long T;
            # keep <= ~48 MiB on v7x (64 MiB physical VMEM per TC).
            vmem_limit_bytes=32 * 1024 * 1024),
    )(x_tm, prepped["wih_t"], whh_t, prepped["bias"],
      prepped["wfc_t"], prepped["bfc_p"])

    return out_pad[:B, :out_size]


# ---------------------------------------------------------------------------
# Pure-JAX reference (mirrors torch.nn.LSTM + Linear exactly, all f32)
# ---------------------------------------------------------------------------
def lstm_agent_ref(x_nchw, params):
    w_ih, w_hh, b_ih, b_hh, w_fc, b_fc = (
        params["w_ih"], params["w_hh"], params["b_ih"], params["b_hh"],
        params["w_fc"], params["b_fc"])
    B, C, T, F = x_nchw.shape
    H = w_hh.shape[1]
    x = x_nchw.reshape(B, T, C * F)

    def step(carry, x_t):
        h, c = carry
        gates = x_t @ w_ih.T + b_ih + h @ w_hh.T + b_hh
        i_g = jax.nn.sigmoid(gates[:, 0 * H:1 * H])
        f_g = jax.nn.sigmoid(gates[:, 1 * H:2 * H])
        g_g = jnp.tanh(gates[:, 2 * H:3 * H])
        o_g = jax.nn.sigmoid(gates[:, 3 * H:4 * H])
        c = f_g * c + i_g * g_g
        h = o_g * jnp.tanh(c)
        return (h, c), None

    h0 = jnp.zeros((B, H), jnp.float32)
    c0 = jnp.zeros((B, H), jnp.float32)
    (h_last, _), _ = lax.scan(step, (h0, c0), jnp.transpose(x, (1, 0, 2)))
    return h_last @ w_fc.T + b_fc


# ---------------------------------------------------------------------------
def init_params(key, input_size, hidden_size, output_size):
    """Deterministic PyTorch-style uniform(-1/sqrt(H), 1/sqrt(H)) init."""
    ks = jax.random.split(key, 6)
    bound = 1.0 / jnp.sqrt(jnp.float32(hidden_size))
    u = lambda k, shape: jax.random.uniform(k, shape, jnp.float32, -bound, bound)
    return {
        "w_ih": u(ks[0], (4 * hidden_size, input_size)),
        "w_hh": u(ks[1], (4 * hidden_size, hidden_size)),
        "b_ih": u(ks[2], (4 * hidden_size,)),
        "b_hh": u(ks[3], (4 * hidden_size,)),
        "w_fc": u(ks[4], (output_size, hidden_size)),
        "b_fc": u(ks[5], (output_size,)),
    }
    # TODO(synk): optimizer / update_parameters (Adam step) are training-side
    # and intentionally not part of the Pallas forward kernel.


if __name__ == "__main__":
    # x: (B=2, C=4, T=16, F=16) -> view -> (2, 16, 64); hidden=32, output=4
    B, C, T, F = 2, 4, 16, 16
    input_size, hidden_size, output_size = C * F, 32, 4

    key = jax.random.PRNGKey(0)
    k_x, k_p = jax.random.split(key)
    x = jax.random.normal(k_x, (B, C, T, F), jnp.float32)
    params = init_params(k_p, input_size, hidden_size, output_size)

    ref = lstm_agent_ref(x, params)

    # One-time parameter prep (hoisted out of the per-call path).
    prepped_bf16 = prepare_lstm_params(params)                       # fast path
    prepped_f32 = prepare_lstm_params(params, matmul_dtype=jnp.float32)

    fwd = jax.jit(lstm_agent_forward, static_argnames=("out_size",))

    # exact-precision path (f32 MXU operands): matches reference at 1e-4
    out_f32 = jax.block_until_ready(fwd(x, prepped_f32, out_size=output_size))
    # fast path (default): bf16 MXU operands, f32 accumulation / f32 state
    out_bf16 = jax.block_until_ready(fwd(x, prepped_bf16, out_size=output_size))

    assert out_bf16.shape == (B, output_size), out_bf16.shape
    assert jnp.allclose(out_f32, ref, atol=1e-4, rtol=1e-4), (
        "f32 kernel mismatch vs reference:\n%s\n%s" % (out_f32, ref))
    # bf16 matmul operands trade mantissa bits for MXU latency; state and
    # nonlinearities stay f32, so drift stays well inside 3e-2 at H=32, T=16.
    assert jnp.allclose(out_bf16, ref, atol=3e-2, rtol=3e-2), (
        "bf16 kernel mismatch vs reference:\n%s\n%s" % (out_bf16, ref))

    print("KERNEL_OK")
</pallas_src>

<mosaic_0001>
module attributes {stable_mosaic.version = 11 : i64} {
  func.func @_lstm_agent_kernel(%arg0: i32, %arg1: memref<16x8x64xf32, #tpu.memory_space<vmem>>, %arg2: memref<64x128xf32, #tpu.memory_space<vmem>>, %arg3: memref<32x128xf32, #tpu.memory_space<vmem>>, %arg4: memref<1x128xf32, #tpu.memory_space<vmem>>, %arg5: memref<32x128xf32, #tpu.memory_space<vmem>>, %arg6: memref<1x128xf32, #tpu.memory_space<vmem>>, %arg7: memref<8x128xf32, #tpu.memory_space<vmem>>, %arg8: memref<128x128xf32, #tpu.memory_space<vmem>>) attributes {dimension_semantics = [#tpu.dimension_semantics<parallel>], iteration_bounds = array<i64: 1>, scalar_prefetch = 0 : i64, scratch_operands = 1 : i64, tpu.core_type = #tpu.core_type<tc>, window_params = [{transform_indices = @transform_0, window_bounds = array<i64: 16, 8, 64>}, {pipeline_mode = #tpu.pipeline_mode<synchronous>, transform_indices = @transform_1, window_bounds = array<i64: 64, 128>}, {pipeline_mode = #tpu.pipeline_mode<synchronous>, transform_indices = @transform_2, window_bounds = array<i64: 32, 128>}, {pipeline_mode = #tpu.pipeline_mode<synchronous>, transform_indices = @transform_3, window_bounds = array<i64: 1, 128>}, {pipeline_mode = #tpu.pipeline_mode<synchronous>, transform_indices = @transform_4, window_bounds = array<i64: 32, 128>}, {pipeline_mode = #tpu.pipeline_mode<synchronous>, transform_indices = @transform_5, window_bounds = array<i64: 1, 128>}, {transform_indices = @transform_6, window_bounds = array<i64: 8, 128>}]} {
    %c0 = arith.constant 0 : index
    %c0_0 = arith.constant 0 : index
    %c0_1 = arith.constant 0 : index
    %0 = vector.load %arg1[%c0, %c0_0, %c0_1] : memref<16x8x64xf32, #tpu.memory_space<vmem>>, vector<16x8x64xf32>
    %1 = vector.shape_cast %0 : vector<16x8x64xf32> to vector<128x64xf32>
    %c0_2 = arith.constant 0 : index
    %c0_3 = arith.constant 0 : index
    %2 = vector.load %arg2[%c0_2, %c0_3] : memref<64x128xf32, #tpu.memory_space<vmem>>, vector<64x128xf32>
    %cst = arith.constant dense<0.000000e+00> : vector<128x128xf32>
    %3 = tpu.matmul %1, %2, %cst {dimension_numbers = #tpu.dot_dimension_numbers<[1], [0], [0], [1], [0, 0, 1, 1], [], []>} : vector<128x64xf32>, vector<64x128xf32>, vector<128x128xf32> -> vector<128x128xf32>
    %c0_4 = arith.constant 0 : index
    %c0_5 = arith.constant 0 : index
    %4 = vector.load %arg4[%c0_4, %c0_5] : memref<1x128xf32, #tpu.memory_space<vmem>>, vector<1x128xf32>
    %5 = vector.broadcast %4 : vector<1x128xf32> to vector<128x128xf32>
    %6 = arith.addf %3, %5 : vector<128x128xf32>
    %c0_6 = arith.constant 0 : index
    %c0_7 = arith.constant 0 : index
    %7 = vector.load %arg8[%c0_6, %c0_7] : memref<128x128xf32, #tpu.memory_space<vmem>>, vector<128x128xf32>
    tpu.vector_store %arg8[%c0_6, %c0_7], %6 {strides = array<i32>} : memref<128x128xf32, #tpu.memory_space<vmem>>, vector<128x128xf32>,
    %cst_8 = arith.constant 0.000000e+00 : f32
    %8 = vector.broadcast %cst_8 : f32 to vector<8x32xf32>
    %cst_9 = arith.constant 0.000000e+00 : f32
    %9 = vector.broadcast %cst_9 : f32 to vector<8x32xf32>
    %c0_i32 = arith.constant 0 : i32
    %c8_i32 = arith.constant 8 : i32
    %10 = arith.muli %c0_i32, %c8_i32 : i32
    %11 = tpu.assume_multiple %10, 8 : i32
    %12 = arith.index_cast %11 : i32 to index
    %c0_10 = arith.constant 0 : index
    %13 = vector.load %arg8[%12, %c0_10] : memref<128x128xf32, #tpu.memory_space<vmem>>, vector<8x128xf32>
    %c0_11 = arith.constant 0 : index
    %c0_12 = arith.constant 0 : index
    %14 = vector.load %arg3[%c0_11, %c0_12] : memref<32x128xf32, #tpu.memory_space<vmem>>, vector<32x128xf32>
    %cst_13 = arith.constant dense<0.000000e+00> : vector<8x128xf32>
    %15 = tpu.matmul %8, %14, %cst_13 {dimension_numbers = #tpu.dot_dimension_numbers<[1], [0], [0], [1], [0, 0, 1, 1], [], []>} : vector<8x32xf32>, vector<32x128xf32>, vector<8x128xf32> -> vector<8x128xf32>
    %16 = arith.addf %13, %15 : vector<8x128xf32>
    %17 = vector.extract_strided_slice %16 {offsets = [0, 0], sizes = [8, 96], strides = [1, 1]} : vector<8x128xf32> to vector<8x96xf32>
    %18 = arith.negf %17 : vector<8x96xf32>
    %19 = math.exp %18 : vector<8x96xf32>
    %cst_14 = arith.constant 1.000000e+00 : f32
    %20 = vector.broadcast %cst_14 : f32 to vector<8x96xf32>
    %21 = arith.addf %20, %19 : vector<8x96xf32>
    %22 = arith.divf %20, %21 : vector<8x96xf32>
    %23 = vector.extract_strided_slice %22 {offsets = [0, 0], sizes = [8, 32], strides = [1, 1]} : vector<8x96xf32> to vector<8x32xf32>
    %24 = vector.extract_strided_slice %22 {offsets = [0, 32], sizes = [8, 32], strides = [1, 1]} : vector<8x96xf32> to vector<8x32xf32>
    %25 = vector.extract_strided_slice %22 {offsets = [0, 64], sizes = [8, 32], strides = [1, 1]} : vector<8x96xf32> to vector<8x32xf32>
    %26 = vector.extract_strided_slice %16 {offsets = [0, 96], sizes = [8, 32], strides = [1, 1]} : vector<8x128xf32> to vector<8x32xf32>
    %27 = math.tanh %26 : vector<8x32xf32>
    %28 = arith.mulf %24, %9 : vector<8x32xf32>
    %29 = arith.mulf %23, %27 : vector<8x32xf32>
    %30 = arith.addf %28, %29 : vector<8x32xf32>
    %31 = math.tanh %30 : vector<8x32xf32>
    %32 = arith.mulf %25, %31 : vector<8x32xf32>
    %c1_i32 = arith.constant 1 : i32
    %c8_i32_15 = arith.constant 8 : i32
    %33 = arith.muli %c1_i32, %c8_i32_15 : i32
    %34 = tpu.assume_multiple %33, 8 : i32
    %35 = arith.index_cast %34 : i32 to index
    %c0_16 = arith.constant 0 : index
    %36 = vector.load %arg8[%35, %c0_16] : memref<128x128xf32, #tpu.memory_space<vmem>>, vector<8x128xf32>
    %c0_17 = arith.constant 0 : index
    %c0_18 = arith.constant 0 : index
    %37 = vector.load %arg3[%c0_17, %c0_18] : memref<32x128xf32, #tpu.memory_space<vmem>>, vector<32x128xf32>
    %cst_19 = arith.constant dense<0.000000e+00> : vector<8x128xf32>
    %38 = tpu.matmul %32, %37, %cst_19 {dimension_numbers = #tpu.dot_dimension_numbers<[1], [0], [0], [1], [0, 0, 1, 1], [], []>} : vector<8x32xf32>, vector<32x128xf32>, vector<8x128xf32> -> vector<8x128xf32>
    %39 = arith.addf %36, %38 : vector<8x128xf32>
    %40 = vector.extract_strided_slice %39 {offsets = [0, 0], sizes = [8, 96], strides = [1, 1]} : vector<8x128xf32> to vector<8x96xf32>
    %41 = arith.negf %40 : vector<8x96xf32>
    %42 = math.exp %41 : vector<8x96xf32>
    %cst_20 = arith.constant 1.000000e+00 : f32
    %43 = vector.broadcast %cst_20 : f32 to vector<8x96xf32>
    %44 = arith.addf %43, %42 : vector<8x96xf32>
    %45 = arith.divf %43, %44 : vector<8x96xf32>
    %46 = vector.extract_strided_slice %45 {offsets = [0, 0], sizes = [8, 32], strides = [1, 1]} : vector<8x96xf32> to vector<8x32xf32>
    %47 = vector.extract_strided_slice %45 {offsets = [0, 32], sizes = [8, 32], strides = [1, 1]} : vector<8x96xf32> to vector<8x32xf32>
    %48 = vector.extract_strided_slice %45 {offsets = [0, 64], sizes = [8, 32], strides = [1, 1]} : vector<8x96xf32> to vector<8x32xf32>
    %49 = vector.extract_strided_slice %39 {offsets = [0, 96], sizes = [8, 32], strides = [1, 1]} : vector<8x128xf32> to vector<8x32xf32>
    %50 = math.tanh %49 : vector<8x32xf32>
    %51 = arith.mulf %47, %30 : vector<8x32xf32>
    %52 = arith.mulf %46, %50 : vector<8x32xf32>
    %53 = arith.addf %51, %52 : vector<8x32xf32>
    %54 = math.tanh %53 : vector<8x32xf32>
    %55 = arith.mulf %48, %54 : vector<8x32xf32>
    %c2_i32 = arith.constant 2 : i32
    %c8_i32_21 = arith.constant 8 : i32
    %56 = arith.muli %c2_i32, %c8_i32_21 : i32
    %57 = tpu.assume_multiple %56, 8 : i32
    %58 = arith.index_cast %57 : i32 to index
    %c0_22 = arith.constant 0 : index
    %59 = vector.load %arg8[%58, %c0_22] : memref<128x128xf32, #tpu.memory_space<vmem>>, vector<8x128xf32>
    %c0_23 = arith.constant 0 : index
    %c0_24 = arith.constant 0 : index
    %60 = vector.load %arg3[%c0_23, %c0_24] : memref<32x128xf32, #tpu.memory_space<vmem>>, vector<32x128xf32>
    %cst_25 = arith.constant dense<0.000000e+00> : vector<8x128xf32>
    %61 = tpu.matmul %55, %60, %cst_25 {dimension_numbers = #tpu.dot_dimension_numbers<[1], [0], [0], [1], [0, 0, 1, 1], [], []>} : vector<8x32xf32>, vector<32x128xf32>, vector<8x128xf32> -> vector<8x128xf32>
    %62 = arith.addf %59, %61 : vector<8x128xf32>
    %63 = vector.extract_strided_slice %62 {offsets = [0, 0], sizes = [8, 96], strides = [1, 1]} : vector<8x128xf32> to vector<8x96xf32>
    %64 = arith.negf %63 : vector<8x96xf32>
    %65 = math.exp %64 : vector<8x96xf32>
    %cst_26 = arith.constant 1.000000e+00 : f32
    %66 = vector.broadcast %cst_26 : f32 to vector<8x96xf32>
    %67 = arith.addf %66, %65 : vector<8x96xf32>
    %68 = arith.divf %66, %67 : vector<8x96xf32>
    %69 = vector.extract_strided_slice %68 {offsets = [0, 0], sizes = [8, 32], strides = [1, 1]} : vector<8x96xf32> to vector<8x32xf32>
    %70 = vector.extract_strided_slice %68 {offsets = [0, 32], sizes = [8, 32], strides = [1, 1]} : vector<8x96xf32> to vector<8x32xf32>
    %71 = vector.extract_strided_slice %68 {offsets = [0, 64], sizes = [8, 32], strides = [1, 1]} : vector<8x96xf32> to vector<8x32xf32>
    %72 = vector.extract_strided_slice %62 {offsets = [0, 96], sizes = [8, 32], strides = [1, 1]} : vector<8x128xf32> to vector<8x32xf32>
    %73 = math.tanh %72 : vector<8x32xf32>
    %74 = arith.mulf %70, %53 : vector<8x32xf32>
    %75 = arith.mulf %69, %73 : vector<8x32xf32>
    %76 = arith.addf %74, %75 : vector<8x32xf32>
    %77 = math.tanh %76 : vector<8x32xf32>
    %78 = arith.mulf %71, %77 : vector<8x32xf32>
    %c3_i32 = arith.constant 3 : i32
    %c8_i32_27 = arith.constant 8 : i32
    %79 = arith.muli %c3_i32, %c8_i32_27 : i32
    %80 = tpu.assume_multiple %79, 8 : i32
    %81 = arith.index_cast %80 : i32 to index
    %c0_28 = arith.constant 0 : index
    %82 = vector.load %arg8[%81, %c0_28] : memref<128x128xf32, #tpu.memory_space<vmem>>, vector<8x128xf32>
    %c0_29 = arith.constant 0 : index
    %c0_30 = arith.constant 0 : index
    %83 = vector.load %arg3[%c0_29, %c0_30] : memref<32x128xf32, #tpu.memory_space<vmem>>, vector<32x128xf32>
    %cst_31 = arith.constant dense<0.000000e+00> : vector<8x128xf32>
    %84 = tpu.matmul %78, %83, %cst_31 {dimension_numbers = #tpu.dot_dimension_numbers<[1], [0], [0], [1], [0, 0, 1, 1], [], []>} : vector<8x32xf32>, vector<32x128xf32>, vector<8x128xf32> -> vector<8x128xf32>
    %85 = arith.addf %82, %84 : vector<8x128xf32>
    %86 = vector.extract_strided_slice %85 {offsets = [0, 0], sizes = [8, 96], strides = [1, 1]} : vector<8x128xf32> to vector<8x96xf32>
    %87 = arith.negf %86 : vector<8x96xf32>
    %88 = math.exp %87 : vector<8x96xf32>
    %cst_32 = arith.constant 1.000000e+00 : f32
    %89 = vector.broadcast %cst_32 : f32 to vector<8x96xf32>
    %90 = arith.addf %89, %88 : vector<8x96xf32>
    %91 = arith.divf %89, %90 : vector<8x96xf32>
    %92 = vector.extract_strided_slice %91 {offsets = [0, 0], sizes = [8, 32], strides = [1, 1]} : vector<8x96xf32> to vector<8x32xf32>
    %93 = vector.extract_strided_slice %91 {offsets = [0, 32], sizes = [8, 32], strides = [1, 1]} : vector<8x96xf32> to vector<8x32xf32>
    %94 = vector.extract_strided_slice %91 {offsets = [0, 64], sizes = [8, 32], strides = [1, 1]} : vector<8x96xf32> to vector<8x32xf32>
    %95 = vector.extract_strided_slice %85 {offsets = [0, 96], sizes = [8, 32], strides = [1, 1]} : vector<8x128xf32> to vector<8x32xf32>
    %96 = math.tanh %95 : vector<8x32xf32>
    %97 = arith.mulf %93, %76 : vector<8x32xf32>
    %98 = arith.mulf %92, %96 : vector<8x32xf32>
    %99 = arith.addf %97, %98 : vector<8x32xf32>
    %100 = math.tanh %99 : vector<8x32xf32>
    %101 = arith.mulf %94, %100 : vector<8x32xf32>
    %c4_i32 = arith.constant 4 : i32
    %c8_i32_33 = arith.constant 8 : i32
    %102 = arith.muli %c4_i32, %c8_i32_33 : i32
    %103 = tpu.assume_multiple %102, 8 : i32
    %104 = arith.index_cast %103 : i32 to index
    %c0_34 = arith.constant 0 : index
    %105 = vector.load %arg8[%104, %c0_34] : memref<128x128xf32, #tpu.memory_space<vmem>>, vector<8x128xf32>
    %c0_35 = arith.constant 0 : index
    %c0_36 = arith.constant 0 : index
    %106 = vector.load %arg3[%c0_35, %c0_36] : memref<32x128xf32, #tpu.memory_space<vmem>>, vector<32x128xf32>
    %cst_37 = arith.constant dense<0.000000e+00> : vector<8x128xf32>
    %107 = tpu.matmul %101, %106, %cst_37 {dimension_numbers = #tpu.dot_dimension_numbers<[1], [0], [0], [1], [0, 0, 1, 1], [], []>} : vector<8x32xf32>, vector<32x128xf32>, vector<8x128xf32> -> vector<8x128xf32>
    %108 = arith.addf %105, %107 : vector<8x128xf32>
    %109 = vector.extract_strided_slice %108 {offsets = [0, 0], sizes = [8, 96], strides = [1, 1]} : vector<8x128xf32> to vector<8x96xf32>
    %110 = arith.negf %109 : vector<8x96xf32>
    %111 = math.exp %110 : vector<8x96xf32>
    %cst_38 = arith.constant 1.000000e+00 : f32
    %112 = vector.broadcast %cst_38 : f32 to vector<8x96xf32>
    %113 = arith.addf %112, %111 : vector<8x96xf32>
    %114 = arith.divf %112, %113 : vector<8x96xf32>
    %115 = vector.extract_strided_slice %114 {offsets = [0, 0], sizes = [8, 32], strides = [1, 1]} : vector<8x96xf32> to vector<8x32xf32>
    %116 = vector.extract_strided_slice %114 {offsets = [0, 32], sizes = [8, 32], strides = [1, 1]} : vector<8x96xf32> to vector<8x32xf32>
    %117 = vector.extract_strided_slice %114 {offsets = [0, 64], sizes = [8, 32], strides = [1, 1]} : vector<8x96xf32> to vector<8x32xf32>
    %118 = vector.extract_strided_slice %108 {offsets = [0, 96], sizes = [8, 32], strides = [1, 1]} : vector<8x128xf32> to vector<8x32xf32>
    %119 = math.tanh %118 : vector<8x32xf32>
    %120 = arith.mulf %116, %99 : vector<8x32xf32>
    %121 = arith.mulf %115, %119 : vector<8x32xf32>
    %122 = arith.addf %120, %121 : vector<8x32xf32>
    %123 = math.tanh %122 : vector<8x32xf32>
    %124 = arith.mulf %117, %123 : vector<8x32xf32>
    %c5_i32 = arith.constant 5 : i32
    %c8_i32_39 = arith.constant 8 : i32
    %125 = arith.muli %c5_i32, %c8_i32_39 : i32
    %126 = tpu.assume_multiple %125, 8 : i32
    %127 = arith.index_cast %126 : i32 to index
    %c0_40 = arith.constant 0 : index
    %128 = vector.load %arg8[%127, %c0_40] : memref<128x128xf32, #tpu.memory_space<vmem>>, vector<8x128xf32>
    %c0_41 = arith.constant 0 : index
    %c0_42 = arith.constant 0 : index
    %129 = vector.load %arg3[%c0_41, %c0_42] : memref<32x128xf32, #tpu.memory_space<vmem>>, vector<32x128xf32>
    %cst_43 = arith.constant dense<0.000000e+00> : vector<8x128xf32>
    %130 = tpu.matmul %124, %129, %cst_43 {dimension_numbers = #tpu.dot_dimension_numbers<[1], [0], [0], [1], [0, 0, 1, 1], [], []>} : vector<8x32xf32>, vector<32x128xf32>, vector<8x128xf32> -> vector<8x128xf32>
    %131 = arith.addf %128, %130 : vector<8x128xf32>
    %132 = vector.extract_strided_slice %131 {offsets = [0, 0], sizes = [8, 96], strides = [1, 1]} : vector<8x128xf32> to vector<8x96xf32>
    %133 = arith.negf %132 : vector<8x96xf32>
    %134 = math.exp %133 : vector<8x96xf32>
    %cst_44 = arith.constant 1.000000e+00 : f32
    %135 = vector.broadcast %cst_44 : f32 to vector<8x96xf32>
    %136 = arith.addf %135, %134 : vector<8x96xf32>
    %137 = arith.divf %135, %136 : vector<8x96xf32>
    %138 = vector.extract_strided_slice %137 {offsets = [0, 0], sizes = [8, 32], strides = [1, 1]} : vector<8x96xf32> to vector<8x32xf32>
    %139 = vector.extract_strided_slice %137 {offsets = [0, 32], sizes = [8, 32], strides = [1, 1]} : vector<8x96xf32> to vector<8x32xf32>
    %140 = vector.extract_strided_slice %137 {offsets = [0, 64], sizes = [8, 32], strides = [1, 1]} : vector<8x96xf32> to vector<8x32xf32>
    %141 = vector.extract_strided_slice %131 {offsets = [0, 96], sizes = [8, 32], strides = [1, 1]} : vector<8x128xf32> to vector<8x32xf32>
    %142 = math.tanh %141 : vector<8x32xf32>
    %143 = arith.mulf %139, %122 : vector<8x32xf32>
    %144 = arith.mulf %138, %142 : vector<8x32xf32>
    %145 = arith.addf %143, %144 : vector<8x32xf32>
    %146 = math.tanh %145 : vector<8x32xf32>
    %147 = arith.mulf %140, %146 : vector<8x32xf32>
    %c6_i32 = arith.constant 6 : i32
    %c8_i32_45 = arith.constant 8 : i32
    %148 = arith.muli %c6_i32, %c8_i32_45 : i32
    %149 = tpu.assume_multiple %148, 8 : i32
    %150 = arith.index_cast %149 : i32 to index
    %c0_46 = arith.constant 0 : index
    %151 = vector.load %arg8[%150, %c0_46] : memref<128x128xf32, #tpu.memory_space<vmem>>, vector<8x128xf32>
    %c0_47 = arith.constant 0 : index
    %c0_48 = arith.constant 0 : index
    %152 = vector.load %arg3[%c0_47, %c0_48] : memref<32x128xf32, #tpu.memory_space<vmem>>, vector<32x128xf32>
    %cst_49 = arith.constant dense<0.000000e+00> : vector<8x128xf32>
    %153 = tpu.matmul %147, %152, %cst_49 {dimension_numbers = #tpu.dot_dimension_numbers<[1], [0], [0], [1], [0, 0, 1, 1], [], []>} : vector<8x32xf32>, vector<32x128xf32>, vector<8x128xf32> -> vector<8x128xf32>
    %154 = arith.addf %151, %153 : vector<8x128xf32>
    %155 = vector.extract_strided_slice %154 {offsets = [0, 0], sizes = [8, 96], strides = [1, 1]} : vector<8x128xf32> to vector<8x96xf32>
    %156 = arith.negf %155 : vector<8x96xf32>
    %157 = math.exp %156 : vector<8x96xf32>
    %cst_50 = arith.constant 1.000000e+00 : f32
    %158 = vector.broadcast %cst_50 : f32 to vector<8x96xf32>
    %159 = arith.addf %158, %157 : vector<8x96xf32>
    %160 = arith.divf %158, %159 : vector<8x96xf32>
    %161 = vector.extract_strided_slice %160 {offsets = [0, 0], sizes = [8, 32], strides = [1, 1]} : vector<8x96xf32> to vector<8x32xf32>
    %162 = vector.extract_strided_slice %160 {offsets = [0, 32], sizes = [8, 32], strides = [1, 1]} : vector<8x96xf32> to vector<8x32xf32>
    %163 = vector.extract_strided_slice %160 {offsets = [0, 64], sizes = [8, 32], strides = [1, 1]} : vector<8x96xf32> to vector<8x32xf32>
    %164 = vector.extract_strided_slice %154 {offsets = [0, 96], sizes = [8, 32], strides = [1, 1]} : vector<8x128xf32> to vector<8x32xf32>
    %165 = math.tanh %164 : vector<8x32xf32>
    %166 = arith.mulf %162, %145 : vector<8x32xf32>
    %167 = arith.mulf %161, %165 : vector<8x32xf32>
    %168 = arith.addf %166, %167 : vector<8x32xf32>
    %169 = math.tanh %168 : vector<8x32xf32>
    %170 = arith.mulf %163, %169 : vector<8x32xf32>
    %c7_i32 = arith.constant 7 : i32
    %c8_i32_51 = arith.constant 8 : i32
    %171 = arith.muli %c7_i32, %c8_i32_51 : i32
    %172 = tpu.assume_multiple %171, 8 : i32
    %173 = arith.index_cast %172 : i32 to index
    %c0_52 = arith.constant 0 : index
    %174 = vector.load %arg8[%173, %c0_52] : memref<128x128xf32, #tpu.memory_space<vmem>>, vector<8x128xf32>
    %c0_53 = arith.constant 0 : index
    %c0_54 = arith.constant 0 : index
    %175 = vector.load %arg3[%c0_53, %c0_54] : memref<32x128xf32, #tpu.memory_space<vmem>>, vector<32x128xf32>
    %cst_55 = arith.constant dense<0.000000e+00> : vector<8x128xf32>
    %176 = tpu.matmul %170, %175, %cst_55 {dimension_numbers = #tpu.dot_dimension_numbers<[1], [0], [0], [1], [0, 0, 1, 1], [], []>} : vector<8x32xf32>, vector<32x128xf32>, vector<8x128xf32> -> vector<8x128xf32>
    %177 = arith.addf %174, %176 : vector<8x128xf32>
    %178 = vector.extract_strided_slice %177 {offsets = [0, 0], sizes = [8, 96], strides = [1, 1]} : vector<8x128xf32> to vector<8x96xf32>
    %179 = arith.negf %178 : vector<8x96xf32>
    %180 = math.exp %179 : vector<8x96xf32>
    %cst_56 = arith.constant 1.000000e+00 : f32
    %181 = vector.broadcast %cst_56 : f32 to vector<8x96xf32>
    %182 = arith.addf %181, %180 : vector<8x96xf32>
    %183 = arith.divf %181, %182 : vector<8x96xf32>
    %184 = vector.extract_strided_slice %183 {offsets = [0, 0], sizes = [8, 32], strides = [1, 1]} : vector<8x96xf32> to vector<8x32xf32>
    %185 = vector.extract_strided_slice %183 {offsets = [0, 32], sizes = [8, 32], strides = [1, 1]} : vector<8x96xf32> to vector<8x32xf32>
    %186 = vector.extract_strided_slice %183 {offsets = [0, 64], sizes = [8, 32], strides = [1, 1]} : vector<8x96xf32> to vector<8x32xf32>
    %187 = vector.extract_strided_slice %177 {offsets = [0, 96], sizes = [8, 32], strides = [1, 1]} : vector<8x128xf32> to vector<8x32xf32>
    %188 = math.tanh %187 : vector<8x32xf32>
    %189 = arith.mulf %185, %168 : vector<8x32xf32>
    %190 = arith.mulf %184, %188 : vector<8x32xf32>
    %191 = arith.addf %189, %190 : vector<8x32xf32>
    %192 = math.tanh %191 : vector<8x32xf32>
    %193 = arith.mulf %186, %192 : vector<8x32xf32>
    %c8_i32_57 = arith.constant 8 : i32
    %c8_i32_58 = arith.constant 8 : i32
    %194 = arith.muli %c8_i32_57, %c8_i32_58 : i32
    %195 = tpu.assume_multiple %194, 8 : i32
    %196 = arith.index_cast %195 : i32 to index
    %c0_59 = arith.constant 0 : index
    %197 = vector.load %arg8[%196, %c0_59] : memref<128x128xf32, #tpu.memory_space<vmem>>, vector<8x128xf32>
    %c0_60 = arith.constant 0 : index
    %c0_61 = arith.constant 0 : index
    %198 = vector.load %arg3[%c0_60, %c0_61] : memref<32x128xf32, #tpu.memory_space<vmem>>, vector<32x128xf32>
    %cst_62 = arith.constant dense<0.000000e+00> : vector<8x128xf32>
    %199 = tpu.matmul %193, %198, %cst_62 {dimension_numbers = #tpu.dot_dimension_numbers<[1], [0], [0], [1], [0, 0, 1, 1], [], []>} : vector<8x32xf32>, vector<32x128xf32>, vector<8x128xf32> -> vector<8x128xf32>
    %200 = arith.addf %197, %199 : vector<8x128xf32>
    %201 = vector.extract_strided_slice %200 {offsets = [0, 0], sizes = [8, 96], strides = [1, 1]} : vector<8x128xf32> to vector<8x96xf32>
    %202 = arith.negf %201 : vector<8x96xf32>
    %203 = math.exp %202 : vector<8x96xf32>
    %cst_63 = arith.constant 1.000000e+00 : f32
    %204 = vector.broadcast %cst_63 : f32 to vector<8x96xf32>
    %205 = arith.addf %204, %203 : vector<8x96xf32>
    %206 = arith.divf %204, %205 : vector<8x96xf32>
    %207 = vector.extract_strided_slice %206 {offsets = [0, 0], sizes = [8, 32], strides = [1, 1]} : vector<8x96xf32> to vector<8x32xf32>
    %208 = vector.extract_strided_slice %206 {offsets = [0, 32], sizes = [8, 32], strides = [1, 1]} : vector<8x96xf32> to vector<8x32xf32>
    %209 = vector.extract_strided_slice %206 {offsets = [0, 64], sizes = [8, 32], strides = [1, 1]} : vector<8x96xf32> to vector<8x32xf32>
    %210 = vector.extract_strided_slice %200 {offsets = [0, 96], sizes = [8, 32], strides = [1, 1]} : vector<8x128xf32> to vector<8x32xf32>
    %211 = math.tanh %210 : vector<8x32xf32>
    %212 = arith.mulf %208, %191 : vector<8x32xf32>
    %213 = arith.mulf %207, %211 : vector<8x32xf32>
    %214 = arith.addf %212, %213 : vector<8x32xf32>
    %215 = math.tanh %214 : vector<8x32xf32>
    %216 = arith.mulf %209, %215 : vector<8x32xf32>
    %c9_i32 = arith.constant 9 : i32
    %c8_i32_64 = arith.constant 8 : i32
    %217 = arith.muli %c9_i32, %c8_i32_64 : i32
    %218 = tpu.assume_multiple %217, 8 : i32
    %219 = arith.index_cast %218 : i32 to index
    %c0_65 = arith.constant 0 : index
    %220 = vector.load %arg8[%219, %c0_65] : memref<128x128xf32, #tpu.memory_space<vmem>>, vector<8x128xf32>
    %c0_66 = arith.constant 0 : index
    %c0_67 = arith.constant 0 : index
    %221 = vector.load %arg3[%c0_66, %c0_67] : memref<32x128xf32, #tpu.memory_space<vmem>>, vector<32x128xf32>
    %cst_68 = arith.constant dense<0.000000e+00> : vector<8x128xf32>
    %222 = tpu.matmul %216, %221, %cst_68 {dimension_numbers = #tpu.dot_dimension_numbers<[1], [0], [0], [1], [0, 0, 1, 1], [], []>} : vector<8x32xf32>, vector<32x128xf32>, vector<8x128xf32> -> vector<8x128xf32>
    %223 = arith.addf %220, %222 : vector<8x128xf32>
    %224 = vector.extract_strided_slice %223 {offsets = [0, 0], sizes = [8, 96], strides = [1, 1]} : vector<8x128xf32> to vector<8x96xf32>
    %225 = arith.negf %224 : vector<8x96xf32>
    %226 = math.exp %225 : vector<8x96xf32>
    %cst_69 = arith.constant 1.000000e+00 : f32
    %227 = vector.broadcast %cst_69 : f32 to vector<8x96xf32>
    %228 = arith.addf %227, %226 : vector<8x96xf32>
    %229 = arith.divf %227, %228 : vector<8x96xf32>
    %230 = vector.extract_strided_slice %229 {offsets = [0, 0], sizes = [8, 32], strides = [1, 1]} : vector<8x96xf32> to vector<8x32xf32>
    %231 = vector.extract_strided_slice %229 {offsets = [0, 32], sizes = [8, 32], strides = [1, 1]} : vector<8x96xf32> to vector<8x32xf32>
    %232 = vector.extract_strided_slice %229 {offsets = [0, 64], sizes = [8, 32], strides = [1, 1]} : vector<8x96xf32> to vector<8x32xf32>
    %233 = vector.extract_strided_slice %223 {offsets = [0, 96], sizes = [8, 32], strides = [1, 1]} : vector<8x128xf32> to vector<8x32xf32>
    %234 = math.tanh %233 : vector<8x32xf32>
    %235 = arith.mulf %231, %214 : vector<8x32xf32>
    %236 = arith.mulf %230, %234 : vector<8x32xf32>
    %237 = arith.addf %235, %236 : vector<8x32xf32>
    %238 = math.tanh %237 : vector<8x32xf32>
    %239 = arith.mulf %232, %238 : vector<8x32xf32>
    %c10_i32 = arith.constant 10 : i32
    %c8_i32_70 = arith.constant 8 : i32
    %240 = arith.muli %c10_i32, %c8_i32_70 : i32
    %241 = tpu.assume_multiple %240, 8 : i32
    %242 = arith.index_cast %241 : i32 to index
    %c0_71 = arith.constant 0 : index
    %243 = vector.load %arg8[%242, %c0_71] : memref<128x128xf32, #tpu.memory_space<vmem>>, vector<8x128xf32>
    %c0_72 = arith.constant 0 : index
    %c0_73 = arith.constant 0 : index
    %244 = vector.load %arg3[%c0_72, %c0_73] : memref<32x128xf32, #tpu.memory_space<vmem>>, vector<32x128xf32>
    %cst_74 = arith.constant dense<0.000000e+00> : vector<8x128xf32>
    %245 = tpu.matmul %239, %244, %cst_74 {dimension_numbers = #tpu.dot_dimension_numbers<[1], [0], [0], [1], [0, 0, 1, 1], [], []>} : vector<8x32xf32>, vector<32x128xf32>, vector<8x128xf32> -> vector<8x128xf32>
    %246 = arith.addf %243, %245 : vector<8x128xf32>
    %247 = vector.extract_strided_slice %246 {offsets = [0, 0], sizes = [8, 96], strides = [1, 1]} : vector<8x128xf32> to vector<8x96xf32>
    %248 = arith.negf %247 : vector<8x96xf32>
    %249 = math.exp %248 : vector<8x96xf32>
    %cst_75 = arith.constant 1.000000e+00 : f32
    %250 = vector.broadcast %cst_75 : f32 to vector<8x96xf32>
    %251 = arith.addf %250, %249 : vector<8x96xf32>
    %252 = arith.divf %250, %251 : vector<8x96xf32>
    %253 = vector.extract_strided_slice %252 {offsets = [0, 0], sizes = [8, 32], strides = [1, 1]} : vector<8x96xf32> to vector<8x32xf32>
    %254 = vector.extract_strided_slice %252 {offsets = [0, 32], sizes = [8, 32], strides = [1, 1]} : vector<8x96xf32> to vector<8x32xf32>
    %255 = vector.extract_strided_slice %252 {offsets = [0, 64], sizes = [8, 32], strides = [1, 1]} : vector<8x96xf32> to vector<8x32xf32>
    %256 = vector.extract_strided_slice %246 {offsets = [0, 96], sizes = [8, 32], strides = [1, 1]} : vector<8x128xf32> to vector<8x32xf32>
    %257 = math.tanh %256 : vector<8x32xf32>
    %258 = arith.mulf %254, %237 : vector<8x32xf32>
    %259 = arith.mulf %253, %257 : vector<8x32xf32>
    %260 = arith.addf %258, %259 : vector<8x32xf32>
    %261 = math.tanh %260 : vector<8x32xf32>
    %262 = arith.mulf %255, %261 : vector<8x32xf32>
    %c11_i32 = arith.constant 11 : i32
    %c8_i32_76 = arith.constant 8 : i32
    %263 = arith.muli %c11_i32, %c8_i32_76 : i32
    %264 = tpu.assume_multiple %263, 8 : i32
    %265 = arith.index_cast %264 : i32 to index
    %c0_77 = arith.constant 0 : index
    %266 = vector.load %arg8[%265, %c0_77] : memref<128x128xf32, #tpu.memory_space<vmem>>, vector<8x128xf32>
    %c0_78 = arith.constant 0 : index
    %c0_79 = arith.constant 0 : index
    %267 = vector.load %arg3[%c0_78, %c0_79] : memref<32x128xf32, #tpu.memory_space<vmem>>, vector<32x128xf32>
    %cst_80 = arith.constant dense<0.000000e+00> : vector<8x128xf32>
    %268 = tpu.matmul %262, %267, %cst_80 {dimension_numbers = #tpu.dot_dimension_numbers<[1], [0], [0], [1], [0, 0, 1, 1], [], []>} : vector<8x32xf32>, vector<32x128xf32>, vector<8x128xf32> -> vector<8x128xf32>
    %269 = arith.addf %266, %268 : vector<8x128xf32>
    %270 = vector.extract_strided_slice %269 {offsets = [0, 0], sizes = [8, 96], strides = [1, 1]} : vector<8x128xf32> to vector<8x96xf32>
    %271 = arith.negf %270 : vector<8x96xf32>
    %272 = math.exp %271 : vector<8x96xf32>
    %cst_81 = arith.constant 1.000000e+00 : f32
    %273 = vector.broadcast %cst_81 : f32 to vector<8x96xf32>
    %274 = arith.addf %273, %272 : vector<8x96xf32>
    %275 = arith.divf %273, %274 : vector<8x96xf32>
    %276 = vector.extract_strided_slice %275 {offsets = [0, 0], sizes = [8, 32], strides = [1, 1]} : vector<8x96xf32> to vector<8x32xf32>
    %277 = vector.extract_strided_slice %275 {offsets = [0, 32], sizes = [8, 32], strides = [1, 1]} : vector<8x96xf32> to vector<8x32xf32>
    %278 = vector.extract_strided_slice %275 {offsets = [0, 64], sizes = [8, 32], strides = [1, 1]} : vector<8x96xf32> to vector<8x32xf32>
    %279 = vector.extract_strided_slice %269 {offsets = [0, 96], sizes = [8, 32], strides = [1, 1]} : vector<8x128xf32> to vector<8x32xf32>
    %280 = math.tanh %279 : vector<8x32xf32>
    %281 = arith.mulf %277, %260 : vector<8x32xf32>
    %282 = arith.mulf %276, %280 : vector<8x32xf32>
    %283 = arith.addf %281, %282 : vector<8x32xf32>
    %284 = math.tanh %283 : vector<8x32xf32>
    %285 = arith.mulf %278, %284 : vector<8x32xf32>
    %c12_i32 = arith.constant 12 : i32
    %c8_i32_82 = arith.constant 8 : i32
    %286 = arith.muli %c12_i32, %c8_i32_82 : i32
    %287 = tpu.assume_multiple %286, 8 : i32
    %288 = arith.index_cast %287 : i32 to index
    %c0_83 = arith.constant 0 : index
    %289 = vector.load %arg8[%288, %c0_83] : memref<128x128xf32, #tpu.memory_space<vmem>>, vector<8x128xf32>
    %c0_84 = arith.constant 0 : index
    %c0_85 = arith.constant 0 : index
    %290 = vector.load %arg3[%c0_84, %c0_85] : memref<32x128xf32, #tpu.memory_space<vmem>>, vector<32x128xf32>
    %cst_86 = arith.constant dense<0.000000e+00> : vector<8x128xf32>
    %291 = tpu.matmul %285, %290, %cst_86 {dimension_numbers = #tpu.dot_dimension_numbers<[1], [0], [0], [1], [0, 0, 1, 1], [], []>} : vector<8x32xf32>, vector<32x128xf32>, vector<8x128xf32> -> vector<8x128xf32>
    %292 = arith.addf %289, %291 : vector<8x128xf32>
    %293 = vector.extract_strided_slice %292 {offsets = [0, 0], sizes = [8, 96], strides = [1, 1]} : vector<8x128xf32> to vector<8x96xf32>
    %294 = arith.negf %293 : vector<8x96xf32>
    %295 = math.exp %294 : vector<8x96xf32>
    %cst_87 = arith.constant 1.000000e+00 : f32
    %296 = vector.broadcast %cst_87 : f32 to vector<8x96xf32>
    %297 = arith.addf %296, %295 : vector<8x96xf32>
    %298 = arith.divf %296, %297 : vector<8x96xf32>
    %299 = vector.extract_strided_slice %298 {offsets = [0, 0], sizes = [8, 32], strides = [1, 1]} : vector<8x96xf32> to vector<8x32xf32>
    %300 = vector.extract_strided_slice %298 {offsets = [0, 32], sizes = [8, 32], strides = [1, 1]} : vector<8x96xf32> to vector<8x32xf32>
    %301 = vector.extract_strided_slice %298 {offsets = [0, 64], sizes = [8, 32], strides = [1, 1]} : vector<8x96xf32> to vector<8x32xf32>
    %302 = vector.extract_strided_slice %292 {offsets = [0, 96], sizes = [8, 32], strides = [1, 1]} : vector<8x128xf32> to vector<8x32xf32>
    %303 = math.tanh %302 : vector<8x32xf32>
    %304 = arith.mulf %300, %283 : vector<8x32xf32>
    %305 = arith.mulf %299, %303 : vector<8x32xf32>
    %306 = arith.addf %304, %305 : vector<8x32xf32>
    %307 = math.tanh %306 : vector<8x32xf32>
    %308 = arith.mulf %301, %307 : vector<8x32xf32>
    %c13_i32 = arith.constant 13 : i32
    %c8_i32_88 = arith.constant 8 : i32
    %309 = arith.muli %c13_i32, %c8_i32_88 : i32
    %310 = tpu.assume_multiple %309, 8 : i32
    %311 = arith.index_cast %310 : i32 to index
    %c0_89 = arith.constant 0 : index
    %312 = vector.load %arg8[%311, %c0_89] : memref<128x128xf32, #tpu.memory_space<vmem>>, vector<8x128xf32>
    %c0_90 = arith.constant 0 : index
    %c0_91 = arith.constant 0 : index
    %313 = vector.load %arg3[%c0_90, %c0_91] : memref<32x128xf32, #tpu.memory_space<vmem>>, vector<32x128xf32>
    %cst_92 = arith.constant dense<0.000000e+00> : vector<8x128xf32>
    %314 = tpu.matmul %308, %313, %cst_92 {dimension_numbers = #tpu.dot_dimension_numbers<[1], [0], [0], [1], [0, 0, 1, 1], [], []>} : vector<8x32xf32>, vector<32x128xf32>, vector<8x128xf32> -> vector<8x128xf32>
    %315 = arith.addf %312, %314 : vector<8x128xf32>
    %316 = vector.extract_strided_slice %315 {offsets = [0, 0], sizes = [8, 96], strides = [1, 1]} : vector<8x128xf32> to vector<8x96xf32>
    %317 = arith.negf %316 : vector<8x96xf32>
    %318 = math.exp %317 : vector<8x96xf32>
    %cst_93 = arith.constant 1.000000e+00 : f32
    %319 = vector.broadcast %cst_93 : f32 to vector<8x96xf32>
    %320 = arith.addf %319, %318 : vector<8x96xf32>
    %321 = arith.divf %319, %320 : vector<8x96xf32>
    %322 = vector.extract_strided_slice %321 {offsets = [0, 0], sizes = [8, 32], strides = [1, 1]} : vector<8x96xf32> to vector<8x32xf32>
    %323 = vector.extract_strided_slice %321 {offsets = [0, 32], sizes = [8, 32], strides = [1, 1]} : vector<8x96xf32> to vector<8x32xf32>
    %324 = vector.extract_strided_slice %321 {offsets = [0, 64], sizes = [8, 32], strides = [1, 1]} : vector<8x96xf32> to vector<8x32xf32>
    %325 = vector.extract_strided_slice %315 {offsets = [0, 96], sizes = [8, 32], strides = [1, 1]} : vector<8x128xf32> to vector<8x32xf32>
    %326 = math.tanh %325 : vector<8x32xf32>
    %327 = arith.mulf %323, %306 : vector<8x32xf32>
    %328 = arith.mulf %322, %326 : vector<8x32xf32>
    %329 = arith.addf %327, %328 : vector<8x32xf32>
    %330 = math.tanh %329 : vector<8x32xf32>
    %331 = arith.mulf %324, %330 : vector<8x32xf32>
    %c14_i32 = arith.constant 14 : i32
    %c8_i32_94 = arith.constant 8 : i32
    %332 = arith.muli %c14_i32, %c8_i32_94 : i32
    %333 = tpu.assume_multiple %332, 8 : i32
    %334 = arith.index_cast %333 : i32 to index
    %c0_95 = arith.constant 0 : index
    %335 = vector.load %arg8[%334, %c0_95] : memref<128x128xf32, #tpu.memory_space<vmem>>, vector<8x128xf32>
    %c0_96 = arith.constant 0 : index
    %c0_97 = arith.constant 0 : index
    %336 = vector.load %arg3[%c0_96, %c0_97] : memref<32x128xf32, #tpu.memory_space<vmem>>, vector<32x128xf32>
    %cst_98 = arith.constant dense<0.000000e+00> : vector<8x128xf32>
    %337 = tpu.matmul %331, %336, %cst_98 {dimension_numbers = #tpu.dot_dimension_numbers<[1], [0], [0], [1], [0, 0, 1, 1], [], []>} : vector<8x32xf32>, vector<32x128xf32>, vector<8x128xf32> -> vector<8x128xf32>
    %338 = arith.addf %335, %337 : vector<8x128xf32>
    %339 = vector.extract_strided_slice %338 {offsets = [0, 0], sizes = [8, 96], strides = [1, 1]} : vector<8x128xf32> to vector<8x96xf32>
    %340 = arith.negf %339 : vector<8x96xf32>
    %341 = math.exp %340 : vector<8x96xf32>
    %cst_99 = arith.constant 1.000000e+00 : f32
    %342 = vector.broadcast %cst_99 : f32 to vector<8x96xf32>
    %343 = arith.addf %342, %341 : vector<8x96xf32>
    %344 = arith.divf %342, %343 : vector<8x96xf32>
    %345 = vector.extract_strided_slice %344 {offsets = [0, 0], sizes = [8, 32], strides = [1, 1]} : vector<8x96xf32> to vector<8x32xf32>
    %346 = vector.extract_strided_slice %344 {offsets = [0, 32], sizes = [8, 32], strides = [1, 1]} : vector<8x96xf32> to vector<8x32xf32>
    %347 = vector.extract_strided_slice %344 {offsets = [0, 64], sizes = [8, 32], strides = [1, 1]} : vector<8x96xf32> to vector<8x32xf32>
    %348 = vector.extract_strided_slice %338 {offsets = [0, 96], sizes = [8, 32], strides = [1, 1]} : vector<8x128xf32> to vector<8x32xf32>
    %349 = math.tanh %348 : vector<8x32xf32>
    %350 = arith.mulf %346, %329 : vector<8x32xf32>
    %351 = arith.mulf %345, %349 : vector<8x32xf32>
    %352 = arith.addf %350, %351 : vector<8x32xf32>
    %353 = math.tanh %352 : vector<8x32xf32>
    %354 = arith.mulf %347, %353 : vector<8x32xf32>
    %c15_i32 = arith.constant 15 : i32
    %c8_i32_100 = arith.constant 8 : i32
    %355 = arith.muli %c15_i32, %c8_i32_100 : i32
    %356 = tpu.assume_multiple %355, 8 : i32
    %357 = arith.index_cast %356 : i32 to index
    %c0_101 = arith.constant 0 : index
    %358 = vector.load %arg8[%357, %c0_101] : memref<128x128xf32, #tpu.memory_space<vmem>>, vector<8x128xf32>
    %c0_102 = arith.constant 0 : index
    %c0_103 = arith.constant 0 : index
    %359 = vector.load %arg3[%c0_102, %c0_103] : memref<32x128xf32, #tpu.memory_space<vmem>>, vector<32x128xf32>
    %cst_104 = arith.constant dense<0.000000e+00> : vector<8x128xf32>
    %360 = tpu.matmul %354, %359, %cst_104 {dimension_numbers = #tpu.dot_dimension_numbers<[1], [0], [0], [1], [0, 0, 1, 1], [], []>} : vector<8x32xf32>, vector<32x128xf32>, vector<8x128xf32> -> vector<8x128xf32>
    %361 = arith.addf %358, %360 : vector<8x128xf32>
    %362 = vector.extract_strided_slice %361 {offsets = [0, 0], sizes = [8, 96], strides = [1, 1]} : vector<8x128xf32> to vector<8x96xf32>
    %363 = arith.negf %362 : vector<8x96xf32>
    %364 = math.exp %363 : vector<8x96xf32>
    %cst_105 = arith.constant 1.000000e+00 : f32
    %365 = vector.broadcast %cst_105 : f32 to vector<8x96xf32>
    %366 = arith.addf %365, %364 : vector<8x96xf32>
    %367 = arith.divf %365, %366 : vector<8x96xf32>
    %368 = vector.extract_strided_slice %367 {offsets = [0, 0], sizes = [8, 32], strides = [1, 1]} : vector<8x96xf32> to vector<8x32xf32>
    %369 = vector.extract_strided_slice %367 {offsets = [0, 32], sizes = [8, 32], strides = [1, 1]} : vector<8x96xf32> to vector<8x32xf32>
    %370 = vector.extract_strided_slice %367 {offsets = [0, 64], sizes = [8, 32], strides = [1, 1]} : vector<8x96xf32> to vector<8x32xf32>
    %371 = vector.extract_strided_slice %361 {offsets = [0, 96], sizes = [8, 32], strides = [1, 1]} : vector<8x128xf32> to vector<8x32xf32>
    %372 = math.tanh %371 : vector<8x32xf32>
    %373 = arith.mulf %369, %352 : vector<8x32xf32>
    %374 = arith.mulf %368, %372 : vector<8x32xf32>
    %375 = arith.addf %373, %374 : vector<8x32xf32>
    %376 = math.tanh %375 : vector<8x32xf32>
    %377 = arith.mulf %370, %376 : vector<8x32xf32>
    %c16_i32 = arith.constant 16 : i32
    %c0_106 = arith.constant 0 : index
    %c0_107 = arith.constant 0 : index
    %378 = vector.load %arg5[%c0_106, %c0_107] : memref<32x128xf32, #tpu.memory_space<vmem>>, vector<32x128xf32>
    %cst_108 = arith.constant dense<0.000000e+00> : vector<8x128xf32>
    %379 = tpu.matmul %377, %378, %cst_108 {dimension_numbers = #tpu.dot_dimension_numbers<[1], [0], [0], [1], [0, 0, 1, 1], [], []>} : vector<8x32xf32>, vector<32x128xf32>, vector<8x128xf32> -> vector<8x128xf32>
    %c0_109 = arith.constant 0 : index
    %c0_110 = arith.constant 0 : index
    %380 = vector.load %arg6[%c0_109, %c0_110] : memref<1x128xf32, #tpu.memory_space<vmem>>, vector<1x128xf32>
    %381 = vector.broadcast %380 : vector<1x128xf32> to vector<8x128xf32>
    %382 = arith.addf %379, %381 : vector<8x128xf32>
    %c0_111 = arith.constant 0 : index
    %c0_112 = arith.constant 0 : index
    %383 = vector.load %arg7[%c0_111, %c0_112] : memref<8x128xf32, #tpu.memory_space<vmem>>, vector<8x128xf32>
    tpu.vector_store %arg7[%c0_111, %c0_112], %382 {strides = array<i32>} : memref<8x128xf32, #tpu.memory_space<vmem>>, vector<8x128xf32>,
    return
  }
  func.func @transform_0(%arg0: i32) -> (i32, i32, i32) {
    %c0_i32 = arith.constant 0 : i32
    %c0_i32_0 = arith.constant 0 : i32
    %c0_i32_1 = arith.constant 0 : i32
    return %c0_i32, %arg0, %c0_i32_0 : i32, i32, i32
  }
  func.func @transform_1(%arg0: i32) -> (i32, i32) {
    %c0_i32 = arith.constant 0 : i32
    %c0_i32_0 = arith.constant 0 : i32
    %c0_i32_1 = arith.constant 0 : i32
    return %c0_i32, %c0_i32_0 : i32, i32
  }
  func.func @transform_2(%arg0: i32) -> (i32, i32) {
    %c0_i32 = arith.constant 0 : i32
    %c0_i32_0 = arith.constant 0 : i32
    %c0_i32_1 = arith.constant 0 : i32
    return %c0_i32, %c0_i32_0 : i32, i32
  }
  func.func @transform_3(%arg0: i32) -> (i32, i32) {
    %c0_i32 = arith.constant 0 : i32
    %c0_i32_0 = arith.constant 0 : i32
    %c0_i32_1 = arith.constant 0 : i32
    return %c0_i32, %c0_i32_0 : i32, i32
  }
  func.func @transform_4(%arg0: i32) -> (i32, i32) {
    %c0_i32 = arith.constant 0 : i32
    %c0_i32_0 = arith.constant 0 : i32
    %c0_i32_1 = arith.constant 0 : i32
    return %c0_i32, %c0_i32_0 : i32, i32
  }
  func.func @transform_5(%arg0: i32) -> (i32, i32) {
    %c0_i32 = arith.constant 0 : i32
    %c0_i32_0 = arith.constant 0 : i32
    %c0_i32_1 = arith.constant 0 : i32
    return %c0_i32, %c0_i32_0 : i32, i32
  }
  func.func @transform_6(%arg0: i32) -> (i32, i32) {
    %c0_i32 = arith.constant 0 : i32
    %c0_i32_0 = arith.constant 0 : i32
    return %arg0, %c0_i32 : i32, i32
  }
}

</mosaic_0001>

<llo_original>
// kernel: lstm_agent_forward.1
$region0: #{lstm_agent_forward.1}
  #allocation0 [shape = 'u32[]', space=smem, size = 0x4, offset = 0x4, fixed_abs, tag = 'smem constant byte address 0x4 - core index']
  #allocation1 [shape = 'u32[144,128]{1,0:T(1,128)}', space=vmem, size = 0x12000, scoped, tag = 'internal scratch']
  #allocation2 [shape = 'f32[128,128]{1,0:T(8,128)}', space=vmem, size = 0x10000, scoped, tag = 'scratch operand']
  %s0 = inlined_call_operand.vmem [shape: f32[16,8,64], index: 0, kind: input, shape index: {}]
  %s1 = inlined_call_operand.vmem [shape: f32[64,128], index: 1, kind: input, shape index: {}]
  %s2 = inlined_call_operand.vmem [shape: f32[32,128], index: 2, kind: input, shape index: {}]
  %s3 = inlined_call_operand.vmem [shape: f32[1,128], index: 3, kind: input, shape index: {}]
  %s4 = inlined_call_operand.vmem [shape: f32[32,128], index: 4, kind: input, shape index: {}]
  %s5 = inlined_call_operand.vmem [shape: f32[1,128], index: 5, kind: input, shape index: {}]
  %s6 = inlined_call_operand.vmem [shape: f32[8,128], index: 6, kind: output, shape index: {}]
  %s7 = sld [smem:[#allocation0]]
  $region34: #{lstm_agent_forward.1} parent=0
    _
  %s9 = ssub.s32 1, %s7
  %s10 = scalar_select 0, %s9, %s7
  // Predicated region
  $region2: #{lstm_agent_forward.1} parent=0 // pred_check
    _
  $region3: #{lstm_agent_forward.1} parent=0 // pred_check_branch
    %12 = sbr.rel (0) target = $region5
  $region4: #{lstm_agent_forward.1} parent=0 // pred_region
    _
  $region5: #{lstm_agent_forward.1} parent=0 // pred_fallthru
    _
  // Predicated region
  $region6: #{lstm_agent_forward.1} parent=0 // pred_check
    _
  $region7: #{lstm_agent_forward.1} parent=0 // pred_check_branch
    %14 = sbr.rel (0) target = $region9
  $region8: #{lstm_agent_forward.1} parent=0 // pred_region
    _
  $region9: #{lstm_agent_forward.1} parent=0 // pred_fallthru
    _
  // Predicated region
  $region10: #{lstm_agent_forward.1} parent=0 // pred_check
    _
  $region11: #{lstm_agent_forward.1} parent=0 // pred_check_branch
    %16 = sbr.rel (0) target = $region13
  $region12: #{lstm_agent_forward.1} parent=0 // pred_region
    _
  $region13: #{lstm_agent_forward.1} parent=0 // pred_fallthru
    _
  // Predicated region
  $region14: #{lstm_agent_forward.1} parent=0 // pred_check
    _
  $region15: #{lstm_agent_forward.1} parent=0 // pred_check_branch
    %18 = sbr.rel (0) target = $region17
  $region16: #{lstm_agent_forward.1} parent=0 // pred_region
    _
  $region17: #{lstm_agent_forward.1} parent=0 // pred_fallthru
    _
  // Predicated region
  $region18: #{lstm_agent_forward.1} parent=0 // pred_check
    _
  $region19: #{lstm_agent_forward.1} parent=0 // pred_check_branch
    %20 = sbr.rel (0) target = $region21
  $region20: #{lstm_agent_forward.1} parent=0 // pred_region
    _
  $region21: #{lstm_agent_forward.1} parent=0 // pred_fallthru
    _
  // Predicated region
  $region22: #{lstm_agent_forward.1} parent=0 // pred_check
    _
  $region23: #{lstm_agent_forward.1} parent=0 // pred_check_branch
    %22 = sbr.rel (0) target = $region25
  $region24: #{lstm_agent_forward.1} parent=0 // pred_region
    _
  $region25: #{lstm_agent_forward.1} parent=0 // pred_fallthru
    _
  %v23 = vld [vmem:[%s0] sm:$0xff]
  %v24 = vld [vmem:[%s0 + $0x8] sm:$0xff]
  %v25 = vld [vmem:[%s0 + $0x10] sm:$0xff]
  %v26 = vld [vmem:[%s0 + $0x18] sm:$0xff]
  %v27 = vld [vmem:[%s0 + $0x20] sm:$0xff]
  %v28 = vld [vmem:[%s0 + $0x28] sm:$0xff]
  %v29 = vld [vmem:[%s0 + $0x30] sm:$0xff]
  %v30 = vld [vmem:[%s0 + $0x38] sm:$0xff]
  %v31 = vld [vmem:[%s0 + $0x40] sm:$0xff]
  %v32 = vld [vmem:[%s0 + $0x48] sm:$0xff]
  %v33 = vld [vmem:[%s0 + $0x50] sm:$0xff]
  %v34 = vld [vmem:[%s0 + $0x58] sm:$0xff]
  %v35 = vld [vmem:[%s0 + $0x60] sm:$0xff]
  %v36 = vld [vmem:[%s0 + $0x68] sm:$0xff]
  %v37 = vld [vmem:[%s0 + $0x70] sm:$0xff]
  %v38 = vld [vmem:[%s0 + $0x78] sm:$0xff]
  %v39 = vld [vmem:[%s1] sm:$0xff]
  %v40 = vld [vmem:[%s1 + $0x8] sm:$0xff]
  %v41 = vld [vmem:[%s1 + $0x10] sm:$0xff]
  %v42 = vld [vmem:[%s1 + $0x18] sm:$0xff]
  %v43 = vld [vmem:[%s1 + $0x20] sm:$0xff]
  %v44 = vld [vmem:[%s1 + $0x28] sm:$0xff]
  %v45 = vld [vmem:[%s1 + $0x30] sm:$0xff]
  %v46 = vld [vmem:[%s1 + $0x38] sm:$0xff]
  %v47 = vld [vmem:[%s3] sm:$0x1]
  %v49 = vlaneseq
  %v50 = vshrl.u32 %v49, 7
  %v51 = vsub.s32 0, %v50
  %v52 = vrot.slane %v47, %v51
  %vm54 = vcmask 523264
  %v56 = vsel %vm54, %v23, 0
  %v59 = vsel %vm54, %v24, 0
  %v62 = vsel %vm54, %v25, 0
  %v65 = vsel %vm54, %v26, 0
  %v68 = vsel %vm54, %v27, 0
  %v71 = vsel %vm54, %v28, 0
  %v74 = vsel %vm54, %v29, 0
  %v77 = vsel %vm54, %v30, 0
  %v80 = vsel %vm54, %v31, 0
  %v83 = vsel %vm54, %v32, 0
  %v86 = vsel %vm54, %v33, 0
  %v89 = vsel %vm54, %v34, 0
  %v92 = vsel %vm54, %v35, 0
  %v95 = vsel %vm54, %v36, 0
  %v98 = vsel %vm54, %v37, 0
  %v101 = vsel %vm54, %v38, 0
  %103 = vmatprep.subr.mxu0 0.0
  %104 = vmatpush1.msra.mxu0 %v39
  %105 = vmatprep.subr.mxu0 0.0
  %106 = vmatpush1.msra.mxu0 %v40
  %107 = vmatprep.subr.mxu0 0.0
  %108 = vmatpush1.msra.mxu0 %v41
  %109 = vmatprep.subr.mxu0 0.0
  %110 = vmatpush1.msra.mxu0 %v42
  %111 = vmatprep.subr.mxu0 0.0
  %112 = vmatpush1.msra.mxu0 %v43
  %113 = vmatprep.subr.mxu0 0.0
  %114 = vmatpush1.msra.mxu0 %v44
  %115 = vmatprep.subr.mxu0 0.0
  %116 = vmatpush1.msra.mxu0 %v45
  %117 = vmatprep.subr.mxu0 0.0
  %118 = vmatpush1.msra.mxu0 %v46
  %119 = vmatprep.subr.mxu0 0.0
  %120 = vmatpush1.msra.mxu0 0.0
  %121 = vmatprep.subr.mxu0 0.0
  %122 = vmatpush1.msra.mxu0 0.0
  %123 = vmatprep.subr.mxu0 0.0
  %124 = vmatpush1.msra.mxu0 0.0
  %125 = vmatprep.subr.mxu0 0.0
  %126 = vmatpush1.msra.mxu0 0.0
  %127 = vmatprep.subr.mxu0 0.0
  %128 = vmatpush1.msra.mxu0 0.0
  %129 = vmatprep.subr.mxu0 0.0
  %130 = vmatpush1.msra.mxu0 0.0
  %131 = vmatprep.subr.mxu0 0.0
  %132 = vmatpush1.msra.mxu0 0.0
  %133 = vmatprep.subr.mxu0 0.0
  %134 = vmatpush1.msra.mxu0 0.0
  %135 = vmatprep.subr.mxu0 0.0
  %136 = vmatpush1.msra.mxu0 0.0
  %137 = vmatprep.subr.mxu0 0.0
  %138 = vmatpush1.msra.mxu0 0.0
  %139 = vmatprep.subr.mxu0 0.0
  %140 = vmatpush1.msra.mxu0 0.0
  %141 = vmatprep.subr.mxu0 0.0
  %142 = vmatpush1.msra.mxu0 0.0
  %143 = vmatprep.subr.mxu0 0.0
  %144 = vmatpush1.msra.mxu0 0.0
  %145 = vmatprep.subr.mxu0 0.0
  %146 = vmatpush1.msra.mxu0 0.0
  %147 = vmatprep.subr.mxu0 0.0
  %148 = vmatpush1.msra.mxu0 0.0
  %149 = vmatprep.subr.mxu0 0.0
  %150 = vmatpush1.msra.mxu0 0.0
  %151 = vmatprep.subr.mxu0 0.0
  %152 = vmatpush1.msra.mxu0 0.0
  %153 = vmatprep.subr.mxu0 0.0
  %154 = vmatpush1.msra.mxu0 0.0
  %155 = vmatprep.subr.mxu0 0.0
  %156 = vmatpush1.msra.mxu0 0.0
  %157 = vmatprep.subr.mxu0 0.0
  %158 = vmatpush1.msra.mxu0 0.0
  %159 = vmatprep.subr.mxu0 0.0
  %160 = vmatpush1.msra.mxu0 0.0
  %161 = vmatprep.subr.mxu0 0.0
  %162 = vmatpush1.msra.mxu0 0.0
  %163 = vmatprep.subr.mxu0 0.0
  %164 = vmatpush1.msra.mxu0 0.0
  %165 = vmatprep.subr.mxu0 0.0
  %166 = vmatpush1.msra.mxu0 0.0
  %167 = vmatprep.mubr.f32.mxu0 0.0
  %168 = vmatmul.mubr.f32.gmra.mrb[0].mxu0 %v56
  %v169 = vpop.f32.mrb[0].mxu0
  %v170 = vadd.f32 %v52, %v169
  %v171 = vpop.f32.mrb[0].mxu0
  %172 = vmatprep.mubr.f32.mxu0 0.0
  %173 = vmatmul.mubr.f32.gmra.mrb[0].mxu0 %v59
  %v174 = vpop.f32.mrb[0].mxu0
  %v175 = vadd.f32 %v52, %v174
  %v176 = vpop.f32.mrb[0].mxu0
  %177 = vmatprep.mubr.f32.mxu0 0.0
  %178 = vmatmul.mubr.f32.gmra.mrb[0].mxu0 %v62
  %v179 = vpop.f32.mrb[0].mxu0
  %v180 = vadd.f32 %v52, %v179
  %v181 = vpop.f32.mrb[0].mxu0
  %182 = vmatprep.mubr.f32.mxu0 0.0
  %183 = vmatmul.mubr.f32.gmra.mrb[0].mxu0 %v65
  %v184 = vpop.f32.mrb[0].mxu0
  %v185 = vadd.f32 %v52, %v184
  %v186 = vpop.f32.mrb[0].mxu0
  %187 = vmatprep.mubr.f32.mxu0 0.0
  %188 = vmatmul.mubr.f32.gmra.mrb[0].mxu0 %v68
  %v189 = vpop.f32.mrb[0].mxu0
  %v190 = vadd.f32 %v52, %v189
  %v191 = vpop.f32.mrb[0].mxu0
  %192 = vmatprep.mubr.f32.mxu0 0.0
  %193 = vmatmul.mubr.f32.gmra.mrb[0].mxu0 %v71
  %v194 = vpop.f32.mrb[0].mxu0
  %v195 = vadd.f32 %v52, %v194
  %v196 = vpop.f32.mrb[0].mxu0
  %197 = vmatprep.mubr.f32.mxu0 0.0
  %198 = vmatmul.mubr.f32.gmra.mrb[0].mxu0 %v74
  %v199 = vpop.f32.mrb[0].mxu0
  %v200 = vadd.f32 %v52, %v199
  %v201 = vpop.f32.mrb[0].mxu0
  %202 = vmatprep.mubr.f32.mxu0 0.0
  %203 = vmatmul.mubr.f32.gmra.mrb[0].mxu0 %v77
  %v204 = vpop.f32.mrb[0].mxu0
  %v205 = vadd.f32 %v52, %v204
  %v206 = vpop.f32.mrb[0].mxu0
  %207 = vmatprep.mubr.f32.mxu0 0.0
  %208 = vmatmul.mubr.f32.gmra.mrb[0].mxu0 %v80
  %v209 = vpop.f32.mrb[0].mxu0
  %v210 = vadd.f32 %v52, %v209
  %v211 = vpop.f32.mrb[0].mxu0
  %212 = vmatprep.mubr.f32.mxu0 0.0
  %213 = vmatmul.mubr.f32.gmra.mrb[0].mxu0 %v83
  %v214 = vpop.f32.mrb[0].mxu0
  %v215 = vadd.f32 %v52, %v214
  %v216 = vpop.f32.mrb[0].mxu0
  %217 = vmatprep.mubr.f32.mxu0 0.0
  %218 = vmatmul.mubr.f32.gmra.mrb[0].mxu0 %v86
  %v219 = vpop.f32.mrb[0].mxu0
  %v220 = vadd.f32 %v52, %v219
  %v221 = vpop.f32.mrb[0].mxu0
  %222 = vmatprep.mubr.f32.mxu0 0.0
  %223 = vmatmul.mubr.f32.gmra.mrb[0].mxu0 %v89
  %v224 = vpop.f32.mrb[0].mxu0
  %v225 = vadd.f32 %v52, %v224
  %v226 = vpop.f32.mrb[0].mxu0
  %227 = vmatprep.mubr.f32.mxu0 0.0
  %228 = vmatmul.mubr.f32.gmra.mrb[0].mxu0 %v92
  %v229 = vpop.f32.mrb[0].mxu0
  %v230 = vadd.f32 %v52, %v229
  %v231 = vpop.f32.mrb[0].mxu0
  %232 = vmatprep.mubr.f32.mxu0 0.0
  %233 = vmatmul.mubr.f32.gmra.mrb[0].mxu0 %v95
  %v234 = vpop.f32.mrb[0].mxu0
  %v235 = vadd.f32 %v52, %v234
  %v236 = vpop.f32.mrb[0].mxu0
  %237 = vmatprep.mubr.f32.mxu0 0.0
  %238 = vmatmul.mubr.f32.gmra.mrb[0].mxu0 %v98
  %v239 = vpop.f32.mrb[0].mxu0
  %v240 = vadd.f32 %v52, %v239
  %v241 = vpop.f32.mrb[0].mxu0
  %242 = vmatprep.mubr.f32.mxu0 0.0
  %243 = vmatmul.mubr.f32.gmra.mrb[0].mxu0 %v101
  %v244 = vpop.f32.mrb[0].mxu0
  %v245 = vadd.f32 %v52, %v244
  %v246 = vpop.f32.mrb[0].mxu0
  %247 = vdwg.mxu0
  %248 = vst [vmem:[#allocation2] sm:$0xff] %v170
  %249 = vst [vmem:[#allocation2 + $0x8] sm:$0xff] %v175
  %250 = vst [vmem:[#allocation2 + $0x10] sm:$0xff] %v180
  %251 = vst [vmem:[#allocation2 + $0x18] sm:$0xff] %v185
  %252 = vst [vmem:[#allocation2 + $0x20] sm:$0xff] %v190
  %253 = vst [vmem:[#allocation2 + $0x28] sm:$0xff] %v195
  %254 = vst [vmem:[#allocation2 + $0x30] sm:$0xff] %v200
  %255 = vst [vmem:[#allocation2 + $0x38] sm:$0xff] %v205
  %256 = vst [vmem:[#allocation2 + $0x40] sm:$0xff] %v210
  %257 = vst [vmem:[#allocation2 + $0x48] sm:$0xff] %v215
  %258 = vst [vmem:[#allocation2 + $0x50] sm:$0xff] %v220
  %259 = vst [vmem:[#allocation2 + $0x58] sm:$0xff] %v225
  %260 = vst [vmem:[#allocation2 + $0x60] sm:$0xff] %v230
  %261 = vst [vmem:[#allocation2 + $0x68] sm:$0xff] %v235
  %262 = vst [vmem:[#allocation2 + $0x70] sm:$0xff] %v240
  %263 = vst [vmem:[#allocation2 + $0x78] sm:$0xff] %v245
  %v264 = vld [vmem:[#allocation2] sm:$0xff]
  %v265 = vld [vmem:[%s2] sm:$0xff]
  %v266 = vld [vmem:[%s2 + $0x8] sm:$0xff]
  %v267 = vld [vmem:[%s2 + $0x10] sm:$0xff]
  %v268 = vld [vmem:[%s2 + $0x18] sm:$0xff]
  %vm269 = vcmask 261120
  %v271 = vsel %vm269, 0.0, 0
  %273 = vmatprep.subr.mxu0 0.0
  %274 = vmatpush1.msra.mxu0 %v265
  %275 = vmatprep.subr.mxu0 0.0
  %276 = vmatpush1.msra.mxu0 %v266
  %277 = vmatprep.subr.mxu0 0.0
  %278 = vmatpush1.msra.mxu0 %v267
  %279 = vmatprep.subr.mxu0 0.0
  %280 = vmatpush1.msra.mxu0 %v268
  %281 = vmatprep.subr.mxu0 0.0
  %282 = vmatpush1.msra.mxu0 0.0
  %283 = vmatprep.subr.mxu0 0.0
  %284 = vmatpush1.msra.mxu0 0.0
  %285 = vmatprep.subr.mxu0 0.0
  %286 = vmatpush1.msra.mxu0 0.0
  %287 = vmatprep.subr.mxu0 0.0
  %288 = vmatpush1.msra.mxu0 0.0
  %289 = vmatprep.subr.mxu0 0.0
  %290 = vmatpush1.msra.mxu0 0.0
  %291 = vmatprep.subr.mxu0 0.0
  %292 = vmatpush1.msra.mxu0 0.0
  %293 = vmatprep.subr.mxu0 0.0
  %294 = vmatpush1.msra.mxu0 0.0
  %295 = vmatprep.subr.mxu0 0.0
  %296 = vmatpush1.msra.mxu0 0.0
  %297 = vmatprep.subr.mxu0 0.0
  %298 = vmatpush1.msra.mxu0 0.0
  %299 = vmatprep.subr.mxu0 0.0
  %300 = vmatpush1.msra.mxu0 0.0
  %301 = vmatprep.subr.mxu0 0.0
  %302 = vmatpush1.msra.mxu0 0.0
  %303 = vmatprep.subr.mxu0 0.0
  %304 = vmatpush1.msra.mxu0 0.0
  %305 = vmatprep.subr.mxu0 0.0
  %306 = vmatpush1.msra.mxu0 0.0
  %307 = vmatprep.subr.mxu0 0.0
  %308 = vmatpush1.msra.mxu0 0.0
  %309 = vmatprep.subr.mxu0 0.0
  %310 = vmatpush1.msra.mxu0 0.0
  %311 = vmatprep.subr.mxu0 0.0
  %312 = vmatpush1.msra.mxu0 0.0
  %313 = vmatprep.subr.mxu0 0.0
  %314 = vmatpush1.msra.mxu0 0.0
  %315 = vmatprep.subr.mxu0 0.0
  %316 = vmatpush1.msra.mxu0 0.0
  %317 = vmatprep.subr.mxu0 0.0
  %318 = vmatpush1.msra.mxu0 0.0
  %319 = vmatprep.subr.mxu0 0.0
  %320 = vmatpush1.msra.mxu0 0.0
  %321 = vmatprep.subr.mxu0 0.0
  %322 = vmatpush1.msra.mxu0 0.0
  %323 = vmatprep.subr.mxu0 0.0
  %324 = vmatpush1.msra.mxu0 0.0
  %325 = vmatprep.subr.mxu0 0.0
  %326 = vmatpush1.msra.mxu0 0.0
  %327 = vmatprep.subr.mxu0 0.0
  %328 = vmatpush1.msra.mxu0 0.0
  %329 = vmatprep.subr.mxu0 0.0
  %330 = vmatpush1.msra.mxu0 0.0
  %331 = vmatprep.subr.mxu0 0.0
  %332 = vmatpush1.msra.mxu0 0.0
  %333 = vmatprep.subr.mxu0 0.0
  %334 = vmatpush1.msra.mxu0 0.0
  %335 = vmatprep.subr.mxu0 0.0
  %336 = vmatpush1.msra.mxu0 0.0
  %337 = vmatprep.mubr.f32.mxu0 0.0
  %338 = vmatmul.mubr.f32.gmra.mrb[0].mxu0 %v271
  %v339 = vpop.f32.mrb[0].mxu0
  %v340 = vadd.f32 0.0, %v339
  %v341 = vpop.f32.mrb[0].mxu0
  %342 = vdwg.mxu0
  %v343 = vadd.f32 %v264, %v340
  %v344 = vxor.u32 %v343, 2147483648
  %v345 = vmul.f32 %v344, 1.442695
  %v346 = vpow.pop %v345
  %v347 = vadd.f32 %v346, 1.0
  %v348 = vrcp.pop %v347
  %v349 = vmul.f32 1.0, %v348
  %v350 = vtanh.pop %v343
  %v351 = vmul.f32 %v349, 0.0
  %353 = vrot.lane.b32.xlu0 %v350, 32
  %v354 = vpop.permute.xlu0 %353
  %v356 = vmul.f32 %v349, %v354
  %358 = vrot.lane.b32.xlu0 %v356, 32
  %v359 = vpop.permute.xlu0 %358
  %v361 = vadd.f32 %v351, %v359
  %v362 = vtanh.pop %v361
  %364 = vrot.lane.b32.xlu0 %v362, 32
  %v365 = vpop.permute.xlu0 %364
  %v367 = vmul.f32 %v349, %v365
  %s368 = scalar_lea.vmem [#allocation2], 8
  %v369 = vld [vmem:[%s368] sm:$0xff]
  %371 = vrot.lane.b32.xlu0 %v367, 64
  %v372 = vpop.permute.xlu0 %371
  %v373 = vsel %vm269, %v372, 0
  %375 = vmatprep.subr.mxu0 0.0
  %376 = vmatpush1.msra.mxu0 %v265
  %377 = vmatprep.subr.mxu0 0.0
  %378 = vmatpush1.msra.mxu0 %v266
  %379 = vmatprep.subr.mxu0 0.0
  %380 = vmatpush1.msra.mxu0 %v267
  %381 = vmatprep.subr.mxu0 0.0
  %382 = vmatpush1.msra.mxu0 %v268
  %383 = vmatprep.subr.mxu0 0.0
  %384 = vmatpush1.msra.mxu0 0.0
  %385 = vmatprep.subr.mxu0 0.0
  %386 = vmatpush1.msra.mxu0 0.0
  %387 = vmatprep.subr.mxu0 0.0
  %388 = vmatpush1.msra.mxu0 0.0
  %389 = vmatprep.subr.mxu0 0.0
  %390 = vmatpush1.msra.mxu0 0.0
  %391 = vmatprep.subr.mxu0 0.0
  %392 = vmatpush1.msra.mxu0 0.0
  %393 = vmatprep.subr.mxu0 0.0
  %394 = vmatpush1.msra.mxu0 0.0
  %395 = vmatprep.subr.mxu0 0.0
  %396 = vmatpush1.msra.mxu0 0.0
  %397 = vmatprep.subr.mxu0 0.0
  %398 = vmatpush1.msra.mxu0 0.0
  %399 = vmatprep.subr.mxu0 0.0
  %400 = vmatpush1.msra.mxu0 0.0
  %401 = vmatprep.subr.mxu0 0.0
  %402 = vmatpush1.msra.mxu0 0.0
  %403 = vmatprep.subr.mxu0 0.0
  %404 = vmatpush1.msra.mxu0 0.0
  %405 = vmatprep.subr.mxu0 0.0
  %406 = vmatpush1.msra.mxu0 0.0
  %407 = vmatprep.subr.mxu0 0.0
  %408 = vmatpush1.msra.mxu0 0.0
  %409 = vmatprep.subr.mxu0 0.0
  %410 = vmatpush1.msra.mxu0 0.0
  %411 = vmatprep.subr.mxu0 0.0
  %412 = vmatpush1.msra.mxu0 0.0
  %413 = vmatprep.subr.mxu0 0.0
  %414 = vmatpush1.msra.mxu0 0.0
  %415 = vmatprep.subr.mxu0 0.0
  %416 = vmatpush1.msra.mxu0 0.0
  %417 = vmatprep.subr.mxu0 0.0
  %418 = vmatpush1.msra.mxu0 0.0
  %419 = vmatprep.subr.mxu0 0.0
  %420 = vmatpush1.msra.mxu0 0.0
  %421 = vmatprep.subr.mxu0 0.0
  %422 = vmatpush1.msra.mxu0 0.0
  %423 = vmatprep.subr.mxu0 0.0
  %424 = vmatpush1.msra.mxu0 0.0
  %425 = vmatprep.subr.mxu0 0.0
  %426 = vmatpush1.msra.mxu0 0.0
  %427 = vmatprep.subr.mxu0 0.0
  %428 = vmatpush1.msra.mxu0 0.0
  %429 = vmatprep.subr.mxu0 0.0
  %430 = vmatpush1.msra.mxu0 0.0
  %431 = vmatprep.subr.mxu0 0.0
  %432 = vmatpush1.msra.mxu0 0.0
  %433 = vmatprep.subr.mxu0 0.0
  %434 = vmatpush1.msra.mxu0 0.0
  %435 = vmatprep.subr.mxu0 0.0
  %436 = vmatpush1.msra.mxu0 0.0
  %437 = vmatprep.subr.mxu0 0.0
  %438 = vmatpush1.msra.mxu0 0.0
  %439 = vmatprep.mubr.f32.mxu0 0.0
  %440 = vmatmul.mubr.f32.gmra.mrb[0].mxu0 %v373
  %v441 = vpop.f32.mrb[0].mxu0
  %v442 = vadd.f32 0.0, %v441
  %v443 = vpop.f32.mrb[0].mxu0
  %444 = vdwg.mxu0
  %v445 = vadd.f32 %v369, %v442
  %v446 = vxor.u32 %v445, 2147483648
  %v447 = vmul.f32 %v446, 1.442695
  %v448 = vpow.pop %v447
  %v449 = vadd.f32 %v448, 1.0
  %v450 = vrcp.pop %v449
  %v451 = vmul.f32 1.0, %v450
  %v452 = vtanh.pop %v445
  %v453 = vmul.f32 %v451, %v361
  %455 = vrot.lane.b32.xlu0 %v452, 32
  %v456 = vpop.permute.xlu0 %455
  %v458 = vmul.f32 %v451, %v456
  %460 = vrot.lane.b32.xlu0 %v458, 32
  %v461 = vpop.permute.xlu0 %460
  %v463 = vadd.f32 %v453, %v461
  %v464 = vtanh.pop %v463
  %466 = vrot.lane.b32.xlu0 %v464, 32
  %v467 = vpop.permute.xlu0 %466
  %v469 = vmul.f32 %v451, %v467
  %s470 = scalar_lea.vmem [#allocation2], 16
  %v471 = vld [vmem:[%s470] sm:$0xff]
  %473 = vrot.lane.b32.xlu0 %v469, 64
  %v474 = vpop.permute.xlu0 %473
  %v475 = vsel %vm269, %v474, 0
  %477 = vmatprep.subr.mxu0 0.0
  %478 = vmatpush1.msra.mxu0 %v265
  %479 = vmatprep.subr.mxu0 0.0
  %480 = vmatpush1.msra.mxu0 %v266
  %481 = vmatprep.subr.mxu0 0.0
  %482 = vmatpush1.msra.mxu0 %v267
  %483 = vmatprep.subr.mxu0 0.0
  %484 = vmatpush1.msra.mxu0 %v268
  %485 = vmatprep.subr.mxu0 0.0
  %486 = vmatpush1.msra.mxu0 0.0
  %487 = vmatprep.subr.mxu0 0.0
  %488 = vmatpush1.msra.mxu0 0.0
  %489 = vmatprep.subr.mxu0 0.0
  %490 = vmatpush1.msra.mxu0 0.0
  %491 = vmatprep.subr.mxu0 0.0
  %492 = vmatpush1.msra.mxu0 0.0
  %493 = vmatprep.subr.mxu0 0.0
  %494 = vmatpush1.msra.mxu0 0.0
  %495 = vmatprep.subr.mxu0 0.0
  %496 = vmatpush1.msra.mxu0 0.0
  %497 = vmatprep.subr.mxu0 0.0
  %498 = vmatpush1.msra.mxu0 0.0
  %499 = vmatprep.subr.mxu0 0.0
  %500 = vmatpush1.msra.mxu0 0.0
  %501 = vmatprep.subr.mxu0 0.0
  %502 = vmatpush1.msra.mxu0 0.0
  %503 = vmatprep.subr.mxu0 0.0
  %504 = vmatpush1.msra.mxu0 0.0
  %505 = vmatprep.subr.mxu0 0.0
  %506 = vmatpush1.msra.mxu0 0.0
  %507 = vmatprep.subr.mxu0 0.0
  %508 = vmatpush1.msra.mxu0 0.0
  %509 = vmatprep.subr.mxu0 0.0
  %510 = vmatpush1.msra.mxu0 0.0
  %511 = vmatprep.subr.mxu0 0.0
  %512 = vmatpush1.msra.mxu0 0.0
  %513 = vmatprep.subr.mxu0 0.0
  %514 = vmatpush1.msra.mxu0 0.0
  %515 = vmatprep.subr.mxu0 0.0
  %516 = vmatpush1.msra.mxu0 0.0
  %517 = vmatprep.subr.mxu0 0.0
  %518 = vmatpush1.msra.mxu0 0.0
  %519 = vmatprep.subr.mxu0 0.0
  %520 = vmatpush1.msra.mxu0 0.0
  %521 = vmatprep.subr.mxu0 0.0
  %522 = vmatpush1.msra.mxu0 0.0
  %523 = vmatprep.subr.mxu0 0.0
  %524 = vmatpush1.msra.mxu0 0.0
  %525 = vmatprep.subr.mxu0 0.0
  %526 = vmatpush1.msra.mxu0 0.0
  %527 = vmatprep.subr.mxu0 0.0
  %528 = vmatpush1.msra.mxu0 0.0
  %529 = vmatprep.subr.mxu0 0.0
  %530 = vmatpush1.msra.mxu0 0.0
  %531 = vmatprep.subr.mxu0 0.0
  %532 = vmatpush1.msra.mxu0 0.0
  %533 = vmatprep.subr.mxu0 0.0
  %534 = vmatpush1.msra.mxu0 0.0
  %535 = vmatprep.subr.mxu0 0.0
  %536 = vmatpush1.msra.mxu0 0.0
  %537 = vmatprep.subr.mxu0 0.0
  %538 = vmatpush1.msra.mxu0 0.0
  %539 = vmatprep.subr.mxu0 0.0
  %540 = vmatpush1.msra.mxu0 0.0
  %541 = vmatprep.mubr.f32.mxu0 0.0
  %542 = vmatmul.mubr.f32.gmra.mrb[0].mxu0 %v475
  %v543 = vpop.f32.mrb[0].mxu0
  %v544 = vadd.f32 0.0, %v543
  %v545 = vpop.f32.mrb[0].mxu0
  %546 = vdwg.mxu0
  %v547 = vadd.f32 %v471, %v544
  %v548 = vxor.u32 %v547, 2147483648
  %v549 = vmul.f32 %v548, 1.442695
  %v550 = vpow.pop %v549
  %v551 = vadd.f32 %v550, 1.0
  %v552 = vrcp.pop %v551
  %v553 = vmul.f32 1.0, %v552
  %v554 = vtanh.pop %v547
  %v555 = vmul.f32 %v553, %v463
  %557 = vrot.lane.b32.xlu0 %v554, 32
  %v558 = vpop.permute.xlu0 %557
  %v560 = vmul.f32 %v553, %v558
  %562 = vrot.lane.b32.xlu0 %v560, 32
  %v563 = vpop.permute.xlu0 %562
  %v565 = vadd.f32 %v555, %v563
  %v566 = vtanh.pop %v565
  %568 = vrot.lane.b32.xlu0 %v566, 32
  %v569 = vpop.permute.xlu0 %568
  %v571 = vmul.f32 %v553, %v569
  %s572 = scalar_lea.vmem [#allocation2], 24
  %v573 = vld [vmem:[%s572] sm:$0xff]
  %575 = vrot.lane.b32.xlu0 %v571, 64
  %v576 = vpop.permute.xlu0 %575
  %v577 = vsel %vm269, %v576, 0
  %579 = vmatprep.subr.mxu0 0.0
  %580 = vmatpush1.msra.mxu0 %v265
  %581 = vmatprep.subr.mxu0 0.0
  %582 = vmatpush1.msra.mxu0 %v266
  %583 = vmatprep.subr.mxu0 0.0
  %584 = vmatpush1.msra.mxu0 %v267
  %585 = vmatprep.subr.mxu0 0.0
  %586 = vmatpush1.msra.mxu0 %v268
  %587 = vmatprep.subr.mxu0 0.0
  %588 = vmatpush1.msra.mxu0 0.0
  %589 = vmatprep.subr.mxu0 0.0
  %590 = vmatpush1.msra.mxu0 0.0
  %591 = vmatprep.subr.mxu0 0.0
  %592 = vmatpush1.msra.mxu0 0.0
  %593 = vmatprep.subr.mxu0 0.0
  %594 = vmatpush1.msra.mxu0 0.0
  %595 = vmatprep.subr.mxu0 0.0
  %596 = vmatpush1.msra.mxu0 0.0
  %597 = vmatprep.subr.mxu0 0.0
  %598 = vmatpush1.msra.mxu0 0.0
  %599 = vmatprep.subr.mxu0 0.0
  %600 = vmatpush1.msra.mxu0 0.0
  %601 = vmatprep.subr.mxu0 0.0
  %602 = vmatpush1.msra.mxu0 0.0
  %603 = vmatprep.subr.mxu0 0.0
  %604 = vmatpush1.msra.mxu0 0.0
  %605 = vmatprep.subr.mxu0 0.0
  %606 = vmatpush1.msra.mxu0 0.0
  %607 = vmatprep.subr.mxu0 0.0
  %608 = vmatpush1.msra.mxu0 0.0
  %609 = vmatprep.subr.mxu0 0.0
  %610 = vmatpush1.msra.mxu0 0.0
  %611 = vmatprep.subr.mxu0 0.0
  %612 = vmatpush1.msra.mxu0 0.0
  %613 = vmatprep.subr.mxu0 0.0
  %614 = vmatpush1.msra.mxu0 0.0
  %615 = vmatprep.subr.mxu0 0.0
  %616 = vmatpush1.msra.mxu0 0.0
  %617 = vmatprep.subr.mxu0 0.0
  %618 = vmatpush1.msra.mxu0 0.0
  %619 = vmatprep.subr.mxu0 0.0
  %620 = vmatpush1.msra.mxu0 0.0
  %621 = vmatprep.subr.mxu0 0.0
  %622 = vmatpush1.msra.mxu0 0.0
  %623 = vmatprep.subr.mxu0 0.0
  %624 = vmatpush1.msra.mxu0 0.0
  %625 = vmatprep.subr.mxu0 0.0
  %626 = vmatpush1.msra.mxu0 0.0
  %627 = vmatprep.subr.mxu0 0.0
  %628 = vmatpush1.msra.mxu0 0.0
  %629 = vmatprep.subr.mxu0 0.0
  %630 = vmatpush1.msra.mxu0 0.0
  %631 = vmatprep.subr.mxu0 0.0
  %632 = vmatpush1.msra.mxu0 0.0
  %633 = vmatprep.subr.mxu0 0.0
  %634 = vmatpush1.msra.mxu0 0.0
  %635 = vmatprep.subr.mxu0 0.0
  %636 = vmatpush1.msra.mxu0 0.0
  %637 = vmatprep.subr.mxu0 0.0
  %638 = vmatpush1.msra.mxu0 0.0
  %639 = vmatprep.subr.mxu0 0.0
  %640 = vmatpush1.msra.mxu0 0.0
  %641 = vmatprep.subr.mxu0 0.0
  %642 = vmatpush1.msra.mxu0 0.0
  %643 = vmatprep.mubr.f32.mxu0 0.0
  %644 = vmatmul.mubr.f32.gmra.mrb[0].mxu0 %v577
  %v645 = vpop.f32.mrb[0].mxu0
  %v646 = vadd.f32 0.0, %v645
  %v647 = vpop.f32.mrb[0].mxu0
  %648 = vdwg.mxu0
  %v649 = vadd.f32 %v573, %v646
  %v650 = vxor.u32 %v649, 2147483648
  %v651 = vmul.f32 %v650, 1.442695
  %v652 = vpow.pop %v651
  %v653 = vadd.f32 %v652, 1.0
  %v654 = vrcp.pop %v653
  %v655 = vmul.f32 1.0, %v654
  %v656 = vtanh.pop %v649
  %v657 = vmul.f32 %v655, %v565
  %659 = vrot.lane.b32.xlu0 %v656, 32
  %v660 = vpop.permute.xlu0 %659
  %v662 = vmul.f32 %v655, %v660
  %664 = vrot.lane.b32.xlu0 %v662, 32
  %v665 = vpop.permute.xlu0 %664
  %v667 = vadd.f32 %v657, %v665
  %v668 = vtanh.pop %v667
  %670 = vrot.lane.b32.xlu0 %v668, 32
  %v671 = vpop.permute.xlu0 %670
  %v673 = vmul.f32 %v655, %v671
  %s674 = scalar_lea.vmem [#allocation2], 32
  %v675 = vld [vmem:[%s674] sm:$0xff]
  %677 = vrot.lane.b32.xlu0 %v673, 64
  %v678 = vpop.permute.xlu0 %677
  %v679 = vsel %vm269, %v678, 0
  %681 = vmatprep.subr.mxu0 0.0
  %682 = vmatpush1.msra.mxu0 %v265
  %683 = vmatprep.subr.mxu0 0.0
  %684 = vmatpush1.msra.mxu0 %v266
  %685 = vmatprep.subr.mxu0 0.0
  %686 = vmatpush1.msra.mxu0 %v267
  %687 = vmatprep.subr.mxu0 0.0
  %688 = vmatpush1.msra.mxu0 %v268
  %689 = vmatprep.subr.mxu0 0.0
  %690 = vmatpush1.msra.mxu0 0.0
  %691 = vmatprep.subr.mxu0 0.0
  %692 = vmatpush1.msra.mxu0 0.0
  %693 = vmatprep.subr.mxu0 0.0
  %694 = vmatpush1.msra.mxu0 0.0
  %695 = vmatprep.subr.mxu0 0.0
  %696 = vmatpush1.msra.mxu0 0.0
  %697 = vmatprep.subr.mxu0 0.0
  %698 = vmatpush1.msra.mxu0 0.0
  %699 = vmatprep.subr.mxu0 0.0
  %700 = vmatpush1.msra.mxu0 0.0
  %701 = vmatprep.subr.mxu0 0.0
  %702 = vmatpush1.msra.mxu0 0.0
  %703 = vmatprep.subr.mxu0 0.0
  %704 = vmatpush1.msra.mxu0 0.0
  %705 = vmatprep.subr.mxu0 0.0
  %706 = vmatpush1.msra.mxu0 0.0
  %707 = vmatprep.subr.mxu0 0.0
  %708 = vmatpush1.msra.mxu0 0.0
  %709 = vmatprep.subr.mxu0 0.0
  %710 = vmatpush1.msra.mxu0 0.0
  %711 = vmatprep.subr.mxu0 0.0
  %712 = vmatpush1.msra.mxu0 0.0
  %713 = vmatprep.subr.mxu0 0.0
  %714 = vmatpush1.msra.mxu0 0.0
  %715 = vmatprep.subr.mxu0 0.0
  %716 = vmatpush1.msra.mxu0 0.0
  %717 = vmatprep.subr.mxu0 0.0
  %718 = vmatpush1.msra.mxu0 0.0
  %719 = vmatprep.subr.mxu0 0.0
  %720 = vmatpush1.msra.mxu0 0.0
  %721 = vmatprep.subr.mxu0 0.0
  %722 = vmatpush1.msra.mxu0 0.0
  %723 = vmatprep.subr.mxu0 0.0
  %724 = vmatpush1.msra.mxu0 0.0
  %725 = vmatprep.subr.mxu0 0.0
  %726 = vmatpush1.msra.mxu0 0.0
  %727 = vmatprep.subr.mxu0 0.0
  %728 = vmatpush1.msra.mxu0 0.0
  %729 = vmatprep.subr.mxu0 0.0
  %730 = vmatpush1.msra.mxu0 0.0
  %731 = vmatprep.subr.mxu0 0.0
  %732 = vmatpush1.msra.mxu0 0.0
  %733 = vmatprep.subr.mxu0 0.0
  %734 = vmatpush1.msra.mxu0 0.0
  %735 = vmatprep.subr.mxu0 0.0
  %736 = vmatpush1.msra.mxu0 0.0
  %737 = vmatprep.subr.mxu0 0.0
  %738 = vmatpush1.msra.mxu0 0.0
  %739 = vmatprep.subr.mxu0 0.0
  %740 = vmatpush1.msra.mxu0 0.0
  %741 = vmatprep.subr.mxu0 0.0
  %742 = vmatpush1.msra.mxu0 0.0
  %743 = vmatprep.subr.mxu0 0.0
  %744 = vmatpush1.msra.mxu0 0.0
  %745 = vmatprep.mubr.f32.mxu0 0.0
  %746 = vmatmul.mubr.f32.gmra.mrb[0].mxu0 %v679
  %v747 = vpop.f32.mrb[0].mxu0
  %v748 = vadd.f32 0.0, %v747
  %v749 = vpop.f32.mrb[0].mxu0
  %750 = vdwg.mxu0
  %v751 = vadd.f32 %v675, %v748
  %v752 = vxor.u32 %v751, 2147483648
  %v753 = vmul.f32 %v752, 1.442695
  %v754 = vpow.pop %v753
  %v755 = vadd.f32 %v754, 1.0
  %v756 = vrcp.pop %v755
  %v757 = vmul.f32 1.0, %v756
  %v758 = vtanh.pop %v751
  %v759 = vmul.f32 %v757, %v667
  %761 = vrot.lane.b32.xlu0 %v758, 32
  %v762 = vpop.permute.xlu0 %761
  %v764 = vmul.f32 %v757, %v762
  %766 = vrot.lane.b32.xlu0 %v764, 32
  %v767 = vpop.permute.xlu0 %766
  %v769 = vadd.f32 %v759, %v767
  %v770 = vtanh.pop %v769
  %772 = vrot.lane.b32.xlu0 %v770, 32
  %v773 = vpop.permute.xlu0 %772
  %v775 = vmul.f32 %v757, %v773
  %s776 = scalar_lea.vmem [#allocation2], 40
  %v777 = vld [vmem:[%s776] sm:$0xff]
  %779 = vrot.lane.b32.xlu0 %v775, 64
  %v780 = vpop.permute.xlu0 %779
  %v781 = vsel %vm269, %v780, 0
  %783 = vmatprep.subr.mxu0 0.0
  %784 = vmatpush1.msra.mxu0 %v265
  %785 = vmatprep.subr.mxu0 0.0
  %786 = vmatpush1.msra.mxu0 %v266
  %787 = vmatprep.subr.mxu0 0.0
  %788 = vmatpush1.msra.mxu0 %v267
  %789 = vmatprep.subr.mxu0 0.0
  %790 = vmatpush1.msra.mxu0 %v268
  %791 = vmatprep.subr.mxu0 0.0
  %792 = vmatpush1.msra.mxu0 0.0
  %793 = vmatprep.subr.mxu0 0.0
  %794 = vmatpush1.msra.mxu0 0.0
  %795 = vmatprep.subr.mxu0 0.0
  %796 = vmatpush1.msra.mxu0 0.0
  %797 = vmatprep.subr.mxu0 0.0
  %798 = vmatpush1.msra.mxu0 0.0
  %799 = vmatprep.subr.mxu0 0.0
  %800 = vmatpush1.msra.mxu0 0.0
  %801 = vmatprep.subr.mxu0 0.0
  %802 = vmatpush1.msra.mxu0 0.0
  %803 = vmatprep.subr.mxu0 0.0
  %804 = vmatpush1.msra.mxu0 0.0
  %805 = vmatprep.subr.mxu0 0.0
  %806 = vmatpush1.msra.mxu0 0.0
  %807 = vmatprep.subr.mxu0 0.0
  %808 = vmatpush1.msra.mxu0 0.0
  %809 = vmatprep.subr.mxu0 0.0
  %810 = vmatpush1.msra.mxu0 0.0
  %811 = vmatprep.subr.mxu0 0.0
  %812 = vmatpush1.msra.mxu0 0.0
  %813 = vmatprep.subr.mxu0 0.0
  %814 = vmatpush1.msra.mxu0 0.0
  %815 = vmatprep.subr.mxu0 0.0
  %816 = vmatpush1.msra.mxu0 0.0
  %817 = vmatprep.subr.mxu0 0.0
  %818 = vmatpush1.msra.mxu0 0.0
  %819 = vmatprep.subr.mxu0 0.0
  %820 = vmatpush1.msra.mxu0 0.0
  %821 = vmatprep.subr.mxu0 0.0
  %822 = vmatpush1.msra.mxu0 0.0
  %823 = vmatprep.subr.mxu0 0.0
  %824 = vmatpush1.msra.mxu0 0.0
  %825 = vmatprep.subr.mxu0 0.0
  %826 = vmatpush1.msra.mxu0 0.0
  %827 = vmatprep.subr.mxu0 0.0
  %828 = vmatpush1.msra.mxu0 0.0
  %829 = vmatprep.subr.mxu0 0.0
  %830 = vmatpush1.msra.mxu0 0.0
  %831 = vmatprep.subr.mxu0 0.0
  %832 = vmatpush1.msra.mxu0 0.0
  %833 = vmatprep.subr.mxu0 0.0
  %834 = vmatpush1.msra.mxu0 0.0
  %835 = vmatprep.subr.mxu0 0.0
  %836 = vmatpush1.msra.mxu0 0.0
  %837 = vmatprep.subr.mxu0 0.0
  %838 = vmatpush1.msra.mxu0 0.0
  %839 = vmatprep.subr.mxu0 0.0
  %840 = vmatpush1.msra.mxu0 0.0
  %841 = vmatprep.subr.mxu0 0.0
  %842 = vmatpush1.msra.mxu0 0.0
  %843 = vmatprep.subr.mxu0 0.0
  %844 = vmatpush1.msra.mxu0 0.0
  %845 = vmatprep.subr.mxu0 0.0
  %846 = vmatpush1.msra.mxu0 0.0
  %847 = vmatprep.mubr.f32.mxu0 0.0
  %848 = vmatmul.mubr.f32.gmra.mrb[0].mxu0 %v781
  %v849 = vpop.f32.mrb[0].mxu0
  %v850 = vadd.f32 0.0, %v849
  %v851 = vpop.f32.mrb[0].mxu0
  %852 = vdwg.mxu0
  %v853 = vadd.f32 %v777, %v850
  %v854 = vxor.u32 %v853, 2147483648
  %v855 = vmul.f32 %v854, 1.442695
  %v856 = vpow.pop %v855
  %v857 = vadd.f32 %v856, 1.0
  %v858 = vrcp.pop %v857
  %v859 = vmul.f32 1.0, %v858
  %v860 = vtanh.pop %v853
  %v861 = vmul.f32 %v859, %v769
  %863 = vrot.lane.b32.xlu0 %v860, 32
  %v864 = vpop.permute.xlu0 %863
  %v866 = vmul.f32 %v859, %v864
  %868 = vrot.lane.b32.xlu0 %v866, 32
  %v869 = vpop.permute.xlu0 %868
  %v871 = vadd.f32 %v861, %v869
  %v872 = vtanh.pop %v871
  %874 = vrot.lane.b32.xlu0 %v872, 32
  %v875 = vpop.permute.xlu0 %874
  %v877 = vmul.f32 %v859, %v875
  %s878 = scalar_lea.vmem [#allocation2], 48
  %v879 = vld [vmem:[%s878] sm:$0xff]
  %881 = vrot.lane.b32.xlu0 %v877, 64
  %v882 = vpop.permute.xlu0 %881
  %v883 = vsel %vm269, %v882, 0
  %885 = vmatprep.subr.mxu0 0.0
  %886 = vmatpush1.msra.mxu0 %v265
  %887 = vmatprep.subr.mxu0 0.0
  %888 = vmatpush1.msra.mxu0 %v266
  %889 = vmatprep.subr.mxu0 0.0
  %890 = vmatpush1.msra.mxu0 %v267
  %891 = vmatprep.subr.mxu0 0.0
  %892 = vmatpush1.msra.mxu0 %v268
  %893 = vmatprep.subr.mxu0 0.0
  %894 = vmatpush1.msra.mxu0 0.0
  %895 = vmatprep.subr.mxu0 0.0
  %896 = vmatpush1.msra.mxu0 0.0
  %897 = vmatprep.subr.mxu0 0.0
  %898 = vmatpush1.msra.mxu0 0.0
  %899 = vmatprep.subr.mxu0 0.0
  %900 = vmatpush1.msra.mxu0 0.0
  %901 = vmatprep.subr.mxu0 0.0
  %902 = vmatpush1.msra.mxu0 0.0
  %903 = vmatprep.subr.mxu0 0.0
  %904 = vmatpush1.msra.mxu0 0.0
  %905 = vmatprep.subr.mxu0 0.0
  %906 = vmatpush1.msra.mxu0 0.0
  %907 = vmatprep.subr.mxu0 0.0
  %908 = vmatpush1.msra.mxu0 0.0
  %909 = vmatprep.subr.mxu0 0.0
  %910 = vmatpush1.msra.mxu0 0.0
  %911 = vmatprep.subr.mxu0 0.0
  %912 = vmatpush1.msra.mxu0 0.0
  %913 = vmatprep.subr.mxu0 0.0
  %914 = vmatpush1.msra.mxu0 0.0
  %915 = vmatprep.subr.mxu0 0.0
  %916 = vmatpush1.msra.mxu0 0.0
  %917 = vmatprep.subr.mxu0 0.0
  %918 = vmatpush1.msra.mxu0 0.0
  %919 = vmatprep.subr.mxu0 0.0
  %920 = vmatpush1.msra.mxu0 0.0
  %921 = vmatprep.subr.mxu0 0.0
  %922 = vmatpush1.msra.mxu0 0.0
  %923 = vmatprep.subr.mxu0 0.0
  %924 = vmatpush1.msra.mxu0 0.0
  %925 = vmatprep.subr.mxu0 0.0
  %926 = vmatpush1.msra.mxu0 0.0
  %927 = vmatprep.subr.mxu0 0.0
  %928 = vmatpush1.msra.mxu0 0.0
  %929 = vmatprep.subr.mxu0 0.0
  %930 = vmatpush1.msra.mxu0 0.0
  %931 = vmatprep.subr.mxu0 0.0
  %932 = vmatpush1.msra.mxu0 0.0
  %933 = vmatprep.subr.mxu0 0.0
  %934 = vmatpush1.msra.mxu0 0.0
  %935 = vmatprep.subr.mxu0 0.0
  %936 = vmatpush1.msra.mxu0 0.0
  %937 = vmatprep.subr.mxu0 0.0
  %938 = vmatpush1.msra.mxu0 0.0
  %939 = vmatprep.subr.mxu0 0.0
  %940 = vmatpush1.msra.mxu0 0.0
  %941 = vmatprep.subr.mxu0 0.0
  %942 = vmatpush1.msra.mxu0 0.0
  %943 = vmatprep.subr.mxu0 0.0
  %944 = vmatpush1.msra.mxu0 0.0
  %945 = vmatprep.subr.mxu0 0.0
  %946 = vmatpush1.msra.mxu0 0.0
  %947 = vmatprep.subr.mxu0 0.0
  %948 = vmatpush1.msra.mxu0 0.0
  %949 = vmatprep.mubr.f32.mxu0 0.0
  %950 = vmatmul.mubr.f32.gmra.mrb[0].mxu0 %v883
  %v951 = vpop.f32.mrb[0].mxu0
  %v952 = vadd.f32 0.0, %v951
  %v953 = vpop.f32.mrb[0].mxu0
  %954 = vdwg.mxu0
  %v955 = vadd.f32 %v879, %v952
  %v956 = vxor.u32 %v955, 2147483648
  %v957 = vmul.f32 %v956, 1.442695
  %v958 = vpow.pop %v957
  %v959 = vadd.f32 %v958, 1.0
  %v960 = vrcp.pop %v959
  %v961 = vmul.f32 1.0, %v960
  %v962 = vtanh.pop %v955
  %v963 = vmul.f32 %v961, %v871
  %965 = vrot.lane.b32.xlu0 %v962, 32
  %v966 = vpop.permute.xlu0 %965
  %v968 = vmul.f32 %v961, %v966
  %970 = vrot.lane.b32.xlu0 %v968, 32
  %v971 = vpop.permute.xlu0 %970
  %v973 = vadd.f32 %v963, %v971
  %v974 = vtanh.pop %v973
  %976 = vrot.lane.b32.xlu0 %v974, 32
  %v977 = vpop.permute.xlu0 %976
  %v979 = vmul.f32 %v961, %v977
  %s980 = scalar_lea.vmem [#allocation2], 56
  %v981 = vld [vmem:[%s980] sm:$0xff]
  %983 = vrot.lane.b32.xlu0 %v979, 64
  %v984 = vpop.permute.xlu0 %983
  %v985 = vsel %vm269, %v984, 0
  %987 = vmatprep.subr.mxu0 0.0
  %988 = vmatpush1.msra.mxu0 %v265
  %989 = vmatprep.subr.mxu0 0.0
  %990 = vmatpush1.msra.mxu0 %v266
  %991 = vmatprep.subr.mxu0 0.0
  %992 = vmatpush1.msra.mxu0 %v267
  %993 = vmatprep.subr.mxu0 0.0
  %994 = vmatpush1.msra.mxu0 %v268
  %995 = vmatprep.subr.mxu0 0.0
  %996 = vmatpush1.msra.mxu0 0.0
  %997 = vmatprep.subr.mxu0 0.0
  %998 = vmatpush1.msra.mxu0 0.0
  %999 = vmatprep.subr.mxu0 0.0
  %1000 = vmatpush1.msra.mxu0 0.0
  %1001 = vmatprep.subr.mxu0 0.0
  %1002 = vmatpush1.msra.mxu0 0.0
  %1003 = vmatprep.subr.mxu0 0.0
  %1004 = vmatpush1.msra.mxu0 0.0
  %1005 = vmatprep.subr.mxu0 0.0
  %1006 = vmatpush1.msra.mxu0 0.0
  %1007 = vmatprep.subr.mxu0 0.0
  %1008 = vmatpush1.msra.mxu0 0.0
  %1009 = vmatprep.subr.mxu0 0.0
  %1010 = vmatpush1.msra.mxu0 0.0
  %1011 = vmatprep.subr.mxu0 0.0
  %1012 = vmatpush1.msra.mxu0 0.0
  %1013 = vmatprep.subr.mxu0 0.0
  %1014 = vmatpush1.msra.mxu0 0.0
  %1015 = vmatprep.subr.mxu0 0.0
  %1016 = vmatpush1.msra.mxu0 0.0
  %1017 = vmatprep.subr.mxu0 0.0
  %1018 = vmatpush1.msra.mxu0 0.0
  %1019 = vmatprep.subr.mxu0 0.0
  %1020 = vmatpush1.msra.mxu0 0.0
  %1021 = vmatprep.subr.mxu0 0.0
  %1022 = vmatpush1.msra.mxu0 0.0
  %1023 = vmatprep.subr.mxu0 0.0
  %1024 = vmatpush1.msra.mxu0 0.0
  %1025 = vmatprep.subr.mxu0 0.0
  %1026 = vmatpush1.msra.mxu0 0.0
  %1027 = vmatprep.subr.mxu0 0.0
  %1028 = vmatpush1.msra.mxu0 0.0
  %1029 = vmatprep.subr.mxu0 0.0
  %1030 = vmatpush1.msra.mxu0 0.0
  %1031 = vmatprep.subr.mxu0 0.0
  %1032 = vmatpush1.msra.mxu0 0.0
  %1033 = vmatprep.subr.mxu0 0.0
  %1034 = vmatpush1.msra.mxu0 0.0
  %1035 = vmatprep.subr.mxu0 0.0
  %1036 = vmatpush1.msra.mxu0 0.0
  %1037 = vmatprep.subr.mxu0 0.0
  %1038 = vmatpush1.msra.mxu0 0.0
  %1039 = vmatprep.subr.mxu0 0.0
  %1040 = vmatpush1.msra.mxu0 0.0
  %1041 = vmatprep.subr.mxu0 0.0
  %1042 = vmatpush1.msra.mxu0 0.0
  %1043 = vmatprep.subr.mxu0 0.0
  %1044 = vmatpush1.msra.mxu0 0.0
  %1045 = vmatprep.subr.mxu0 0.0
  %1046 = vmatpush1.msra.mxu0 0.0
  %1047 = vmatprep.subr.mxu0 0.0
  %1048 = vmatpush1.msra.mxu0 0.0
  %1049 = vmatprep.subr.mxu0 0.0
  %1050 = vmatpush1.msra.mxu0 0.0
  %1051 = vmatprep.mubr.f32.mxu0 0.0
  %1052 = vmatmul.mubr.f32.gmra.mrb[0].mxu0 %v985
  %v1053 = vpop.f32.mrb[0].mxu0
  %v1054 = vadd.f32 0.0, %v1053
  %v1055 = vpop.f32.mrb[0].mxu0
  %1056 = vdwg.mxu0
  %v1057 = vadd.f32 %v981, %v1054
  %v1058 = vxor.u32 %v1057, 2147483648
  %v1059 = vmul.f32 %v1058, 1.442695
  %v1060 = vpow.pop %v1059
  %v1061 = vadd.f32 %v1060, 1.0
  %v1062 = vrcp.pop %v1061
  %v1063 = vmul.f32 1.0, %v1062
  %v1064 = vtanh.pop %v1057
  %v1065 = vmul.f32 %v1063, %v973
  %1067 = vrot.lane.b32.xlu0 %v1064, 32
  %v1068 = vpop.permute.xlu0 %1067
  %v1070 = vmul.f32 %v1063, %v1068
  %1072 = vrot.lane.b32.xlu0 %v1070, 32
  %v1073 = vpop.permute.xlu0 %1072
  %v1075 = vadd.f32 %v1065, %v1073
  %v1076 = vtanh.pop %v1075
  %1078 = vrot.lane.b32.xlu0 %v1076, 32
  %v1079 = vpop.permute.xlu0 %1078
  %v1081 = vmul.f32 %v1063, %v1079
  %s1082 = scalar_lea.vmem [#allocation2], 64
  %v1083 = vld [vmem:[%s1082] sm:$0xff]
  %1085 = vrot.lane.b32.xlu0 %v1081, 64
  %v1086 = vpop.permute.xlu0 %1085
  %v1087 = vsel %vm269, %v1086, 0
  %1089 = vmatprep.subr.mxu0 0.0
  %1090 = vmatpush1.msra.mxu0 %v265
  %1091 = vmatprep.subr.mxu0 0.0
  %1092 = vmatpush1.msra.mxu0 %v266
  %1093 = vmatprep.subr.mxu0 0.0
  %1094 = vmatpush1.msra.mxu0 %v267
  %1095 = vmatprep.subr.mxu0 0.0
  %1096 = vmatpush1.msra.mxu0 %v268
  %1097 = vmatprep.subr.mxu0 0.0
  %1098 = vmatpush1.msra.mxu0 0.0
  %1099 = vmatprep.subr.mxu0 0.0
  %1100 = vmatpush1.msra.mxu0 0.0
  %1101 = vmatprep.subr.mxu0 0.0
  %1102 = vmatpush1.msra.mxu0 0.0
  %1103 = vmatprep.subr.mxu0 0.0
  %1104 = vmatpush1.msra.mxu0 0.0
  %1105 = vmatprep.subr.mxu0 0.0
  %1106 = vmatpush1.msra.mxu0 0.0
  %1107 = vmatprep.subr.mxu0 0.0
  %1108 = vmatpush1.msra.mxu0 0.0
  %1109 = vmatprep.subr.mxu0 0.0
  %1110 = vmatpush1.msra.mxu0 0.0
  %1111 = vmatprep.subr.mxu0 0.0
  %1112 = vmatpush1.msra.mxu0 0.0
  %1113 = vmatprep.subr.mxu0 0.0
  %1114 = vmatpush1.msra.mxu0 0.0
  %1115 = vmatprep.subr.mxu0 0.0
  %1116 = vmatpush1.msra.mxu0 0.0
  %1117 = vmatprep.subr.mxu0 0.0
  %1118 = vmatpush1.msra.mxu0 0.0
  %1119 = vmatprep.subr.mxu0 0.0
  %1120 = vmatpush1.msra.mxu0 0.0
  %1121 = vmatprep.subr.mxu0 0.0
  %1122 = vmatpush1.msra.mxu0 0.0
  %1123 = vmatprep.subr.mxu0 0.0
  %1124 = vmatpush1.msra.mxu0 0.0
  %1125 = vmatprep.subr.mxu0 0.0
  %1126 = vmatpush1.msra.mxu0 0.0
  %1127 = vmatprep.subr.mxu0 0.0
  %1128 = vmatpush1.msra.mxu0 0.0
  %1129 = vmatprep.subr.mxu0 0.0
  %1130 = vmatpush1.msra.mxu0 0.0
  %1131 = vmatprep.subr.mxu0 0.0
  %1132 = vmatpush1.msra.mxu0 0.0
  %1133 = vmatprep.subr.mxu0 0.0
  %1134 = vmatpush1.msra.mxu0 0.0
  %1135 = vmatprep.subr.mxu0 0.0
  %1136 = vmatpush1.msra.mxu0 0.0
  %1137 = vmatprep.subr.mxu0 0.0
  %1138 = vmatpush1.msra.mxu0 0.0
  %1139 = vmatprep.subr.mxu0 0.0
  %1140 = vmatpush1.msra.mxu0 0.0
  %1141 = vmatprep.subr.mxu0 0.0
  %1142 = vmatpush1.msra.mxu0 0.0
  %1143 = vmatprep.subr.mxu0 0.0
  %1144 = vmatpush1.msra.mxu0 0.0
  %1145 = vmatprep.subr.mxu0 0.0
  %1146 = vmatpush1.msra.mxu0 0.0
  %1147 = vmatprep.subr.mxu0 0.0
  %1148 = vmatpush1.msra.mxu0 0.0
  %1149 = vmatprep.subr.mxu0 0.0
  %1150 = vmatpush1.msra.mxu0 0.0
  %1151 = vmatprep.subr.mxu0 0.0
  %1152 = vmatpush1.msra.mxu0 0.0
  %1153 = vmatprep.mubr.f32.mxu0 0.0
  %1154 = vmatmul.mubr.f32.gmra.mrb[0].mxu0 %v1087
  %v1155 = vpop.f32.mrb[0].mxu0
  %v1156 = vadd.f32 0.0, %v1155
  %v1157 = vpop.f32.mrb[0].mxu0
  %1158 = vdwg.mxu0
  %v1159 = vadd.f32 %v1083, %v1156
  %v1160 = vxor.u32 %v1159, 2147483648
  %v1161 = vmul.f32 %v1160, 1.442695
  %v1162 = vpow.pop %v1161
  %v1163 = vadd.f32 %v1162, 1.0
  %v1164 = vrcp.pop %v1163
  %v1165 = vmul.f32 1.0, %v1164
  %v1166 = vtanh.pop %v1159
  %v1167 = vmul.f32 %v1165, %v1075
  %1169 = vrot.lane.b32.xlu0 %v1166, 32
  %v1170 = vpop.permute.xlu0 %1169
  %v1172 = vmul.f32 %v1165, %v1170
  %1174 = vrot.lane.b32.xlu0 %v1172, 32
  %v1175 = vpop.permute.xlu0 %1174
  %v1177 = vadd.f32 %v1167, %v1175
  %v1178 = vtanh.pop %v1177
  %1180 = vrot.lane.b32.xlu0 %v1178, 32
  %v1181 = vpop.permute.xlu0 %1180
  %v1183 = vmul.f32 %v1165, %v1181
  %s1184 = scalar_lea.vmem [#allocation2], 72
  %v1185 = vld [vmem:[%s1184] sm:$0xff]
  %1187 = vrot.lane.b32.xlu0 %v1183, 64
  %v1188 = vpop.permute.xlu0 %1187
  %v1189 = vsel %vm269, %v1188, 0
  %1191 = vmatprep.subr.mxu0 0.0
  %1192 = vmatpush1.msra.mxu0 %v265
  %1193 = vmatprep.subr.mxu0 0.0
  %1194 = vmatpush1.msra.mxu0 %v266
  %1195 = vmatprep.subr.mxu0 0.0
  %1196 = vmatpush1.msra.mxu0 %v267
  %1197 = vmatprep.subr.mxu0 0.0
  %1198 = vmatpush1.msra.mxu0 %v268
  %1199 = vmatprep.subr.mxu0 0.0
  %1200 = vmatpush1.msra.mxu0 0.0
  %1201 = vmatprep.subr.mxu0 0.0
  %1202 = vmatpush1.msra.mxu0 0.0
  %1203 = vmatprep.subr.mxu0 0.0
  %1204 = vmatpush1.msra.mxu0 0.0
  %1205 = vmatprep.subr.mxu0 0.0
  %1206 = vmatpush1.msra.mxu0 0.0
  %1207 = vmatprep.subr.mxu0 0.0
  %1208 = vmatpush1.msra.mxu0 0.0
  %1209 = vmatprep.subr.mxu0 0.0
  %1210 = vmatpush1.msra.mxu0 0.0
  %1211 = vmatprep.subr.mxu0 0.0
  %1212 = vmatpush1.msra.mxu0 0.0
  %1213 = vmatprep.subr.mxu0 0.0
  %1214 = vmatpush1.msra.mxu0 0.0
  %1215 = vmatprep.subr.mxu0 0.0
  %1216 = vmatpush1.msra.mxu0 0.0
  %1217 = vmatprep.subr.mxu0 0.0
  %1218 = vmatpush1.msra.mxu0 0.0
  %1219 = vmatprep.subr.mxu0 0.0
  %1220 = vmatpush1.msra.mxu0 0.0
  %1221 = vmatprep.subr.mxu0 0.0
  %1222 = vmatpush1.msra.mxu0 0.0
  %1223 = vmatprep.subr.mxu0 0.0
  %1224 = vmatpush1.msra.mxu0 0.0
  %1225 = vmatprep.subr.mxu0 0.0
  %1226 = vmatpush1.msra.mxu0 0.0
  %1227 = vmatprep.subr.mxu0 0.0
  %1228 = vmatpush1.msra.mxu0 0.0
  %1229 = vmatprep.subr.mxu0 0.0
  %1230 = vmatpush1.msra.mxu0 0.0
  %1231 = vmatprep.subr.mxu0 0.0
  %1232 = vmatpush1.msra.mxu0 0.0
  %1233 = vmatprep.subr.mxu0 0.0
  %1234 = vmatpush1.msra.mxu0 0.0
  %1235 = vmatprep.subr.mxu0 0.0
  %1236 = vmatpush1.msra.mxu0 0.0
  %1237 = vmatprep.subr.mxu0 0.0
  %1238 = vmatpush1.msra.mxu0 0.0
  %1239 = vmatprep.subr.mxu0 0.0
  %1240 = vmatpush1.msra.mxu0 0.0
  %1241 = vmatprep.subr.mxu0 0.0
  %1242 = vmatpush1.msra.mxu0 0.0
  %1243 = vmatprep.subr.mxu0 0.0
  %1244 = vmatpush1.msra.mxu0 0.0
  %1245 = vmatprep.subr.mxu0 0.0
  %1246 = vmatpush1.msra.mxu0 0.0
  %1247 = vmatprep.subr.mxu0 0.0
  %1248 = vmatpush1.msra.mxu0 0.0
  %1249 = vmatprep.subr.mxu0 0.0
  %1250 = vmatpush1.msra.mxu0 0.0
  %1251 = vmatprep.subr.mxu0 0.0
  %1252 = vmatpush1.msra.mxu0 0.0
  %1253 = vmatprep.subr.mxu0 0.0
  %1254 = vmatpush1.msra.mxu0 0.0
  %1255 = vmatprep.mubr.f32.mxu0 0.0
  %1256 = vmatmul.mubr.f32.gmra.mrb[0].mxu0 %v1189
  %v1257 = vpop.f32.mrb[0].mxu0
  %v1258 = vadd.f32 0.0, %v1257
  %v1259 = vpop.f32.mrb[0].mxu0
  %1260 = vdwg.mxu0
  %v1261 = vadd.f32 %v1185, %v1258
  %v1262 = vxor.u32 %v1261, 2147483648
  %v1263 = vmul.f32 %v1262, 1.442695
  %v1264 = vpow.pop %v1263
  %v1265 = vadd.f32 %v1264, 1.0
  %v1266 = vrcp.pop %v1265
  %v1267 = vmul.f32 1.0, %v1266
  %v1268 = vtanh.pop %v1261
  %v1269 = vmul.f32 %v1267, %v1177
  %1271 = vrot.lane.b32.xlu0 %v1268, 32
  %v1272 = vpop.permute.xlu0 %1271
  %v1274 = vmul.f32 %v1267, %v1272
  %1276 = vrot.lane.b32.xlu0 %v1274, 32
  %v1277 = vpop.permute.xlu0 %1276
  %v1279 = vadd.f32 %v1269, %v1277
  %v1280 = vtanh.pop %v1279
  %1282 = vrot.lane.b32.xlu0 %v1280, 32
  %v1283 = vpop.permute.xlu0 %1282
  %v1285 = vmul.f32 %v1267, %v1283
  %s1286 = scalar_lea.vmem [#allocation2], 80
  %v1287 = vld [vmem:[%s1286] sm:$0xff]
  %1289 = vrot.lane.b32.xlu0 %v1285, 64
  %v1290 = vpop.permute.xlu0 %1289
  %v1291 = vsel %vm269, %v1290, 0
  %1293 = vmatprep.subr.mxu0 0.0
  %1294 = vmatpush1.msra.mxu0 %v265
  %1295 = vmatprep.subr.mxu0 0.0
  %1296 = vmatpush1.msra.mxu0 %v266
  %1297 = vmatprep.subr.mxu0 0.0
  %1298 = vmatpush1.msra.mxu0 %v267
  %1299 = vmatprep.subr.mxu0 0.0
  %1300 = vmatpush1.msra.mxu0 %v268
  %1301 = vmatprep.subr.mxu0 0.0
  %1302 = vmatpush1.msra.mxu0 0.0
  %1303 = vmatprep.subr.mxu0 0.0
  %1304 = vmatpush1.msra.mxu0 0.0
  %1305 = vmatprep.subr.mxu0 0.0
  %1306 = vmatpush1.msra.mxu0 0.0
  %1307 = vmatprep.subr.mxu0 0.0
  %1308 = vmatpush1.msra.mxu0 0.0
  %1309 = vmatprep.subr.mxu0 0.0
  %1310 = vmatpush1.msra.mxu0 0.0
  %1311 = vmatprep.subr.mxu0 0.0
  %1312 = vmatpush1.msra.mxu0 0.0
  %1313 = vmatprep.subr.mxu0 0.0
  %1314 = vmatpush1.msra.mxu0 0.0
  %1315 = vmatprep.subr.mxu0 0.0
  %1316 = vmatpush1.msra.mxu0 0.0
  %1317 = vmatprep.subr.mxu0 0.0
  %1318 = vmatpush1.msra.mxu0 0.0
  %1319 = vmatprep.subr.mxu0 0.0
  %1320 = vmatpush1.msra.mxu0 0.0
  %1321 = vmatprep.subr.mxu0 0.0
  %1322 = vmatpush1.msra.mxu0 0.0
  %1323 = vmatprep.subr.mxu0 0.0
  %1324 = vmatpush1.msra.mxu0 0.0
  %1325 = vmatprep.subr.mxu0 0.0
  %1326 = vmatpush1.msra.mxu0 0.0
  %1327 = vmatprep.subr.mxu0 0.0
  %1328 = vmatpush1.msra.mxu0 0.0
  %1329 = vmatprep.subr.mxu0 0.0
  %1330 = vmatpush1.msra.mxu0 0.0
  %1331 = vmatprep.subr.mxu0 0.0
  %1332 = vmatpush1.msra.mxu0 0.0
  %1333 = vmatprep.subr.mxu0 0.0
  %1334 = vmatpush1.msra.mxu0 0.0
  %1335 = vmatprep.subr.mxu0 0.0
  %1336 = vmatpush1.msra.mxu0 0.0
  %1337 = vmatprep.subr.mxu0 0.0
  %1338 = vmatpush1.msra.mxu0 0.0
  %1339 = vmatprep.subr.mxu0 0.0
  %1340 = vmatpush1.msra.mxu0 0.0
  %1341 = vmatprep.subr.mxu0 0.0
  %1342 = vmatpush1.msra.mxu0 0.0
  %1343 = vmatprep.subr.mxu0 0.0
  %1344 = vmatpush1.msra.mxu0 0.0
  %1345 = vmatprep.subr.mxu0 0.0
  %1346 = vmatpush1.msra.mxu0 0.0
  %1347 = vmatprep.subr.mxu0 0.0
  %1348 = vmatpush1.msra.mxu0 0.0
  %1349 = vmatprep.subr.mxu0 0.0
  %1350 = vmatpush1.msra.mxu0 0.0
  %1351 = vmatprep.subr.mxu0 0.0
  %1352 = vmatpush1.msra.mxu0 0.0
  %1353 = vmatprep.subr.mxu0 0.0
  %1354 = vmatpush1.msra.mxu0 0.0
  %1355 = vmatprep.subr.mxu0 0.0
  %1356 = vmatpush1.msra.mxu0 0.0
  %1357 = vmatprep.mubr.f32.mxu0 0.0
  %1358 = vmatmul.mubr.f32.gmra.mrb[0].mxu0 %v1291
  %v1359 = vpop.f32.mrb[0].mxu0
  %v1360 = vadd.f32 0.0, %v1359
  %v1361 = vpop.f32.mrb[0].mxu0
  %1362 = vdwg.mxu0
  %v1363 = vadd.f32 %v1287, %v1360
  %v1364 = vxor.u32 %v1363, 2147483648
  %v1365 = vmul.f32 %v1364, 1.442695
  %v1366 = vpow.pop %v1365
  %v1367 = vadd.f32 %v1366, 1.0
  %v1368 = vrcp.pop %v1367
  %v1369 = vmul.f32 1.0, %v1368
  %v1370 = vtanh.pop %v1363
  %v1371 = vmul.f32 %v1369, %v1279
  %1373 = vrot.lane.b32.xlu0 %v1370, 32
  %v1374 = vpop.permute.xlu0 %1373
  %v1376 = vmul.f32 %v1369, %v1374
  %1378 = vrot.lane.b32.xlu0 %v1376, 32
  %v1379 = vpop.permute.xlu0 %1378
  %v1381 = vadd.f32 %v1371, %v1379
  %v1382 = vtanh.pop %v1381
  %1384 = vrot.lane.b32.xlu0 %v1382, 32
  %v1385 = vpop.permute.xlu0 %1384
  %v1387 = vmul.f32 %v1369, %v1385
  %s1388 = scalar_lea.vmem [#allocation2], 88
  %v1389 = vld [vmem:[%s1388] sm:$0xff]
  %1391 = vrot.lane.b32.xlu0 %v1387, 64
  %v1392 = vpop.permute.xlu0 %1391
  %v1393 = vsel %vm269, %v1392, 0
  %1395 = vmatprep.subr.mxu0 0.0
  %1396 = vmatpush1.msra.mxu0 %v265
  %1397 = vmatprep.subr.mxu0 0.0
  %1398 = vmatpush1.msra.mxu0 %v266
  %1399 = vmatprep.subr.mxu0 0.0
  %1400 = vmatpush1.msra.mxu0 %v267
  %1401 = vmatprep.subr.mxu0 0.0
  %1402 = vmatpush1.msra.mxu0 %v268
  %1403 = vmatprep.subr.mxu0 0.0
  %1404 = vmatpush1.msra.mxu0 0.0
  %1405 = vmatprep.subr.mxu0 0.0
  %1406 = vmatpush1.msra.mxu0 0.0
  %1407 = vmatprep.subr.mxu0 0.0
  %1408 = vmatpush1.msra.mxu0 0.0
  %1409 = vmatprep.subr.mxu0 0.0
  %1410 = vmatpush1.msra.mxu0 0.0
  %1411 = vmatprep.subr.mxu0 0.0
  %1412 = vmatpush1.msra.mxu0 0.0
  %1413 = vmatprep.subr.mxu0 0.0
  %1414 = vmatpush1.msra.mxu0 0.0
  %1415 = vmatprep.subr.mxu0 0.0
  %1416 = vmatpush1.msra.mxu0 0.0
  %1417 = vmatprep.subr.mxu0 0.0
  %1418 = vmatpush1.msra.mxu0 0.0
  %1419 = vmatprep.subr.mxu0 0.0
  %1420 = vmatpush1.msra.mxu0 0.0
  %1421 = vmatprep.subr.mxu0 0.0
  %1422 = vmatpush1.msra.mxu0 0.0
  %1423 = vmatprep.subr.mxu0 0.0
  %1424 = vmatpush1.msra.mxu0 0.0
  %1425 = vmatprep.subr.mxu0 0.0
  %1426 = vmatpush1.msra.mxu0 0.0
  %1427 = vmatprep.subr.mxu0 0.0
  %1428 = vmatpush1.msra.mxu0 0.0
  %1429 = vmatprep.subr.mxu0 0.0
  %1430 = vmatpush1.msra.mxu0 0.0
  %1431 = vmatprep.subr.mxu0 0.0
  %1432 = vmatpush1.msra.mxu0 0.0
  %1433 = vmatprep.subr.mxu0 0.0
  %1434 = vmatpush1.msra.mxu0 0.0
  %1435 = vmatprep.subr.mxu0 0.0
  %1436 = vmatpush1.msra.mxu0 0.0
  %1437 = vmatprep.subr.mxu0 0.0
  %1438 = vmatpush1.msra.mxu0 0.0
  %1439 = vmatprep.subr.mxu0 0.0
  %1440 = vmatpush1.msra.mxu0 0.0
  %1441 = vmatprep.subr.mxu0 0.0
  %1442 = vmatpush1.msra.mxu0 0.0
  %1443 = vmatprep.subr.mxu0 0.0
  %1444 = vmatpush1.msra.mxu0 0.0
  %1445 = vmatprep.subr.mxu0 0.0
  %1446 = vmatpush1.msra.mxu0 0.0
  %1447 = vmatprep.subr.mxu0 0.0
  %1448 = vmatpush1.msra.mxu0 0.0
  %1449 = vmatprep.subr.mxu0 0.0
  %1450 = vmatpush1.msra.mxu0 0.0
  %1451 = vmatprep.subr.mxu0 0.0
  %1452 = vmatpush1.msra.mxu0 0.0
  %1453 = vmatprep.subr.mxu0 0.0
  %1454 = vmatpush1.msra.mxu0 0.0
  %1455 = vmatprep.subr.mxu0 0.0
  %1456 = vmatpush1.msra.mxu0 0.0
  %1457 = vmatprep.subr.mxu0 0.0
  %1458 = vmatpush1.msra.mxu0 0.0
  %1459 = vmatprep.mubr.f32.mxu0 0.0
  %1460 = vmatmul.mubr.f32.gmra.mrb[0].mxu0 %v1393
  %v1461 = vpop.f32.mrb[0].mxu0
  %v1462 = vadd.f32 0.0, %v1461
  %v1463 = vpop.f32.mrb[0].mxu0
  %1464 = vdwg.mxu0
  %v1465 = vadd.f32 %v1389, %v1462
  %v1466 = vxor.u32 %v1465, 2147483648
  %v1467 = vmul.f32 %v1466, 1.442695
  %v1468 = vpow.pop %v1467
  %v1469 = vadd.f32 %v1468, 1.0
  %v1470 = vrcp.pop %v1469
  %v1471 = vmul.f32 1.0, %v1470
  %v1472 = vtanh.pop %v1465
  %v1473 = vmul.f32 %v1471, %v1381
  %1475 = vrot.lane.b32.xlu0 %v1472, 32
  %v1476 = vpop.permute.xlu0 %1475
  %v1478 = vmul.f32 %v1471, %v1476
  %1480 = vrot.lane.b32.xlu0 %v1478, 32
  %v1481 = vpop.permute.xlu0 %1480
  %v1483 = vadd.f32 %v1473, %v1481
  %v1484 = vtanh.pop %v1483
  %1486 = vrot.lane.b32.xlu0 %v1484, 32
  %v1487 = vpop.permute.xlu0 %1486
  %v1489 = vmul.f32 %v1471, %v1487
  %s1490 = scalar_lea.vmem [#allocation2], 96
  %v1491 = vld [vmem:[%s1490] sm:$0xff]
  %1493 = vrot.lane.b32.xlu0 %v1489, 64
  %v1494 = vpop.permute.xlu0 %1493
  %v1495 = vsel %vm269, %v1494, 0
  %1497 = vmatprep.subr.mxu0 0.0
  %1498 = vmatpush1.msra.mxu0 %v265
  %1499 = vmatprep.subr.mxu0 0.0
  %1500 = vmatpush1.msra.mxu0 %v266
  %1501 = vmatprep.subr.mxu0 0.0
  %1502 = vmatpush1.msra.mxu0 %v267
  %1503 = vmatprep.subr.mxu0 0.0
  %1504 = vmatpush1.msra.mxu0 %v268
  %1505 = vmatprep.subr.mxu0 0.0
  %1506 = vmatpush1.msra.mxu0 0.0
  %1507 = vmatprep.subr.mxu0 0.0
  %1508 = vmatpush1.msra.mxu0 0.0
  %1509 = vmatprep.subr.mxu0 0.0
  %1510 = vmatpush1.msra.mxu0 0.0
  %1511 = vmatprep.subr.mxu0 0.0
  %1512 = vmatpush1.msra.mxu0 0.0
  %1513 = vmatprep.subr.mxu0 0.0
  %1514 = vmatpush1.msra.mxu0 0.0
  %1515 = vmatprep.subr.mxu0 0.0
  %1516 = vmatpush1.msra.mxu0 0.0
  %1517 = vmatprep.subr.mxu0 0.0
  %1518 = vmatpush1.msra.mxu0 0.0
  %1519 = vmatprep.subr.mxu0 0.0
  %1520 = vmatpush1.msra.mxu0 0.0
  %1521 = vmatprep.subr.mxu0 0.0
  %1522 = vmatpush1.msra.mxu0 0.0
  %1523 = vmatprep.subr.mxu0 0.0
  %1524 = vmatpush1.msra.mxu0 0.0
  %1525 = vmatprep.subr.mxu0 0.0
  %1526 = vmatpush1.msra.mxu0 0.0
  %1527 = vmatprep.subr.mxu0 0.0
  %1528 = vmatpush1.msra.mxu0 0.0
  %1529 = vmatprep.subr.mxu0 0.0
  %1530 = vmatpush1.msra.mxu0 0.0
  %1531 = vmatprep.subr.mxu0 0.0
  %1532 = vmatpush1.msra.mxu0 0.0
  %1533 = vmatprep.subr.mxu0 0.0
  %1534 = vmatpush1.msra.mxu0 0.0
  %1535 = vmatprep.subr.mxu0 0.0
  %1536 = vmatpush1.msra.mxu0 0.0
  %1537 = vmatprep.subr.mxu0 0.0
  %1538 = vmatpush1.msra.mxu0 0.0
  %1539 = vmatprep.subr.mxu0 0.0
  %1540 = vmatpush1.msra.mxu0 0.0
  %1541 = vmatprep.subr.mxu0 0.0
  %1542 = vmatpush1.msra.mxu0 0.0
  %1543 = vmatprep.subr.mxu0 0.0
  %1544 = vmatpush1.msra.mxu0 0.0
  %1545 = vmatprep.subr.mxu0 0.0
  %1546 = vmatpush1.msra.mxu0 0.0
  %1547 = vmatprep.subr.mxu0 0.0
  %1548 = vmatpush1.msra.mxu0 0.0
  %1549 = vmatprep.subr.mxu0 0.0
  %1550 = vmatpush1.msra.mxu0 0.0
  %1551 = vmatprep.subr.mxu0 0.0
  %1552 = vmatpush1.msra.mxu0 0.0
  %1553 = vmatprep.subr.mxu0 0.0
  %1554 = vmatpush1.msra.mxu0 0.0
  %1555 = vmatprep.subr.mxu0 0.0
  %1556 = vmatpush1.msra.mxu0 0.0
  %1557 = vmatprep.subr.mxu0 0.0
  %1558 = vmatpush1.msra.mxu0 0.0
  %1559 = vmatprep.subr.mxu0 0.0
  %1560 = vmatpush1.msra.mxu0 0.0
  %1561 = vmatprep.mubr.f32.mxu0 0.0
  %1562 = vmatmul.mubr.f32.gmra.mrb[0].mxu0 %v1495
  %v1563 = vpop.f32.mrb[0].mxu0
  %v1564 = vadd.f32 0.0, %v1563
  %v1565 = vpop.f32.mrb[0].mxu0
  %1566 = vdwg.mxu0
  %v1567 = vadd.f32 %v1491, %v1564
  %v1568 = vxor.u32 %v1567, 2147483648
  %v1569 = vmul.f32 %v1568, 1.442695
  %v1570 = vpow.pop %v1569
  %v1571 = vadd.f32 %v1570, 1.0
  %v1572 = vrcp.pop %v1571
  %v1573 = vmul.f32 1.0, %v1572
  %v1574 = vtanh.pop %v1567
  %v1575 = vmul.f32 %v1573, %v1483
  %1577 = vrot.lane.b32.xlu0 %v1574, 32
  %v1578 = vpop.permute.xlu0 %1577
  %v1580 = vmul.f32 %v1573, %v1578
  %1582 = vrot.lane.b32.xlu0 %v1580, 32
  %v1583 = vpop.permute.xlu0 %1582
  %v1585 = vadd.f32 %v1575, %v1583
  %v1586 = vtanh.pop %v1585
  %1588 = vrot.lane.b32.xlu0 %v1586, 32
  %v1589 = vpop.permute.xlu0 %1588
  %v1591 = vmul.f32 %v1573, %v1589
  %s1592 = scalar_lea.vmem [#allocation2], 104
  %v1593 = vld [vmem:[%s1592] sm:$0xff]
  %1595 = vrot.lane.b32.xlu0 %v1591, 64
  %v1596 = vpop.permute.xlu0 %1595
  %v1597 = vsel %vm269, %v1596, 0
  %1599 = vmatprep.subr.mxu0 0.0
  %1600 = vmatpush1.msra.mxu0 %v265
  %1601 = vmatprep.subr.mxu0 0.0
  %1602 = vmatpush1.msra.mxu0 %v266
  %1603 = vmatprep.subr.mxu0 0.0
  %1604 = vmatpush1.msra.mxu0 %v267
  %1605 = vmatprep.subr.mxu0 0.0
  %1606 = vmatpush1.msra.mxu0 %v268
  %1607 = vmatprep.subr.mxu0 0.0
  %1608 = vmatpush1.msra.mxu0 0.0
  %1609 = vmatprep.subr.mxu0 0.0
  %1610 = vmatpush1.msra.mxu0 0.0
  %1611 = vmatprep.subr.mxu0 0.0
  %1612 = vmatpush1.msra.mxu0 0.0
  %1613 = vmatprep.subr.mxu0 0.0
  %1614 = vmatpush1.msra.mxu0 0.0
  %1615 = vmatprep.subr.mxu0 0.0
  %1616 = vmatpush1.msra.mxu0 0.0
  %1617 = vmatprep.subr.mxu0 0.0
  %1618 = vmatpush1.msra.mxu0 0.0
  %1619 = vmatprep.subr.mxu0 0.0
  %1620 = vmatpush1.msra.mxu0 0.0
  %1621 = vmatprep.subr.mxu0 0.0
  %1622 = vmatpush1.msra.mxu0 0.0
  %1623 = vmatprep.subr.mxu0 0.0
  %1624 = vmatpush1.msra.mxu0 0.0
  %1625 = vmatprep.subr.mxu0 0.0
  %1626 = vmatpush1.msra.mxu0 0.0
  %1627 = vmatprep.subr.mxu0 0.0
  %1628 = vmatpush1.msra.mxu0 0.0
  %1629 = vmatprep.subr.mxu0 0.0
  %1630 = vmatpush1.msra.mxu0 0.0
  %1631 = vmatprep.subr.mxu0 0.0
  %1632 = vmatpush1.msra.mxu0 0.0
  %1633 = vmatprep.subr.mxu0 0.0
  %1634 = vmatpush1.msra.mxu0 0.0
  %1635 = vmatprep.subr.mxu0 0.0
  %1636 = vmatpush1.msra.mxu0 0.0
  %1637 = vmatprep.subr.mxu0 0.0
  %1638 = vmatpush1.msra.mxu0 0.0
  %1639 = vmatprep.subr.mxu0 0.0
  %1640 = vmatpush1.msra.mxu0 0.0
  %1641 = vmatprep.subr.mxu0 0.0
  %1642 = vmatpush1.msra.mxu0 0.0
  %1643 = vmatprep.subr.mxu0 0.0
  %1644 = vmatpush1.msra.mxu0 0.0
  %1645 = vmatprep.subr.mxu0 0.0
  %1646 = vmatpush1.msra.mxu0 0.0
  %1647 = vmatprep.subr.mxu0 0.0
  %1648 = vmatpush1.msra.mxu0 0.0
  %1649 = vmatprep.subr.mxu0 0.0
  %1650 = vmatpush1.msra.mxu0 0.0
  %1651 = vmatprep.subr.mxu0 0.0
  %1652 = vmatpush1.msra.mxu0 0.0
  %1653 = vmatprep.subr.mxu0 0.0
  %1654 = vmatpush1.msra.mxu0 0.0
  %1655 = vmatprep.subr.mxu0 0.0
  %1656 = vmatpush1.msra.mxu0 0.0
  %1657 = vmatprep.subr.mxu0 0.0
  %1658 = vmatpush1.msra.mxu0 0.0
  %1659 = vmatprep.subr.mxu0 0.0
  %1660 = vmatpush1.msra.mxu0 0.0
  %1661 = vmatprep.subr.mxu0 0.0
  %1662 = vmatpush1.msra.mxu0 0.0
  %1663 = vmatprep.mubr.f32.mxu0 0.0
  %1664 = vmatmul.mubr.f32.gmra.mrb[0].mxu0 %v1597
  %v1665 = vpop.f32.mrb[0].mxu0
  %v1666 = vadd.f32 0.0, %v1665
  %v1667 = vpop.f32.mrb[0].mxu0
  %1668 = vdwg.mxu0
  %v1669 = vadd.f32 %v1593, %v1666
  %v1670 = vxor.u32 %v1669, 2147483648
  %v1671 = vmul.f32 %v1670, 1.442695
  %v1672 = vpow.pop %v1671
  %v1673 = vadd.f32 %v1672, 1.0
  %v1674 = vrcp.pop %v1673
  %v1675 = vmul.f32 1.0, %v1674
  %v1676 = vtanh.pop %v1669
  %v1677 = vmul.f32 %v1675, %v1585
  %1679 = vrot.lane.b32.xlu0 %v1676, 32
  %v1680 = vpop.permute.xlu0 %1679
  %v1682 = vmul.f32 %v1675, %v1680
  %1684 = vrot.lane.b32.xlu0 %v1682, 32
  %v1685 = vpop.permute.xlu0 %1684
  %v1687 = vadd.f32 %v1677, %v1685
  %v1688 = vtanh.pop %v1687
  %1690 = vrot.lane.b32.xlu0 %v1688, 32
  %v1691 = vpop.permute.xlu0 %1690
  %v1693 = vmul.f32 %v1675, %v1691
  %s1694 = scalar_lea.vmem [#allocation2], 112
  %v1695 = vld [vmem:[%s1694] sm:$0xff]
  %1697 = vrot.lane.b32.xlu0 %v1693, 64
  %v1698 = vpop.permute.xlu0 %1697
  %v1699 = vsel %vm269, %v1698, 0
  %1701 = vmatprep.subr.mxu0 0.0
  %1702 = vmatpush1.msra.mxu0 %v265
  %1703 = vmatprep.subr.mxu0 0.0
  %1704 = vmatpush1.msra.mxu0 %v266
  %1705 = vmatprep.subr.mxu0 0.0
  %1706 = vmatpush1.msra.mxu0 %v267
  %1707 = vmatprep.subr.mxu0 0.0
  %1708 = vmatpush1.msra.mxu0 %v268
  %1709 = vmatprep.subr.mxu0 0.0
  %1710 = vmatpush1.msra.mxu0 0.0
  %1711 = vmatprep.subr.mxu0 0.0
  %1712 = vmatpush1.msra.mxu0 0.0
  %1713 = vmatprep.subr.mxu0 0.0
  %1714 = vmatpush1.msra.mxu0 0.0
  %1715 = vmatprep.subr.mxu0 0.0
  %1716 = vmatpush1.msra.mxu0 0.0
  %1717 = vmatprep.subr.mxu0 0.0
  %1718 = vmatpush1.msra.mxu0 0.0
  %1719 = vmatprep.subr.mxu0 0.0
  %1720 = vmatpush1.msra.mxu0 0.0
  %1721 = vmatprep.subr.mxu0 0.0
  %1722 = vmatpush1.msra.mxu0 0.0
  %1723 = vmatprep.subr.mxu0 0.0
  %1724 = vmatpush1.msra.mxu0 0.0
  %1725 = vmatprep.subr.mxu0 0.0
  %1726 = vmatpush1.msra.mxu0 0.0
  %1727 = vmatprep.subr.mxu0 0.0
  %1728 = vmatpush1.msra.mxu0 0.0
  %1729 = vmatprep.subr.mxu0 0.0
  %1730 = vmatpush1.msra.mxu0 0.0
  %1731 = vmatprep.subr.mxu0 0.0
  %1732 = vmatpush1.msra.mxu0 0.0
  %1733 = vmatprep.subr.mxu0 0.0
  %1734 = vmatpush1.msra.mxu0 0.0
  %1735 = vmatprep.subr.mxu0 0.0
  %1736 = vmatpush1.msra.mxu0 0.0
  %1737 = vmatprep.subr.mxu0 0.0
  %1738 = vmatpush1.msra.mxu0 0.0
  %1739 = vmatprep.subr.mxu0 0.0
  %1740 = vmatpush1.msra.mxu0 0.0
  %1741 = vmatprep.subr.mxu0 0.0
  %1742 = vmatpush1.msra.mxu0 0.0
  %1743 = vmatprep.subr.mxu0 0.0
  %1744 = vmatpush1.msra.mxu0 0.0
  %1745 = vmatprep.subr.mxu0 0.0
  %1746 = vmatpush1.msra.mxu0 0.0
  %1747 = vmatprep.subr.mxu0 0.0
  %1748 = vmatpush1.msra.mxu0 0.0
  %1749 = vmatprep.subr.mxu0 0.0
  %1750 = vmatpush1.msra.mxu0 0.0
  %1751 = vmatprep.subr.mxu0 0.0
  %1752 = vmatpush1.msra.mxu0 0.0
  %1753 = vmatprep.subr.mxu0 0.0
  %1754 = vmatpush1.msra.mxu0 0.0
  %1755 = vmatprep.subr.mxu0 0.0
  %1756 = vmatpush1.msra.mxu0 0.0
  %1757 = vmatprep.subr.mxu0 0.0
  %1758 = vmatpush1.msra.mxu0 0.0
  %1759 = vmatprep.subr.mxu0 0.0
  %1760 = vmatpush1.msra.mxu0 0.0
  %1761 = vmatprep.subr.mxu0 0.0
  %1762 = vmatpush1.msra.mxu0 0.0
  %1763 = vmatprep.subr.mxu0 0.0
  %1764 = vmatpush1.msra.mxu0 0.0
  %1765 = vmatprep.mubr.f32.mxu0 0.0
  %1766 = vmatmul.mubr.f32.gmra.mrb[0].mxu0 %v1699
  %v1767 = vpop.f32.mrb[0].mxu0
  %v1768 = vadd.f32 0.0, %v1767
  %v1769 = vpop.f32.mrb[0].mxu0
  %1770 = vdwg.mxu0
  %v1771 = vadd.f32 %v1695, %v1768
  %v1772 = vxor.u32 %v1771, 2147483648
  %v1773 = vmul.f32 %v1772, 1.442695
  %v1774 = vpow.pop %v1773
  %v1775 = vadd.f32 %v1774, 1.0
  %v1776 = vrcp.pop %v1775
  %v1777 = vmul.f32 1.0, %v1776
  %v1778 = vtanh.pop %v1771
  %v1779 = vmul.f32 %v1777, %v1687
  %1781 = vrot.lane.b32.xlu0 %v1778, 32
  %v1782 = vpop.permute.xlu0 %1781
  %v1784 = vmul.f32 %v1777, %v1782
  %1786 = vrot.lane.b32.xlu0 %v1784, 32
  %v1787 = vpop.permute.xlu0 %1786
  %v1789 = vadd.f32 %v1779, %v1787
  %v1790 = vtanh.pop %v1789
  %1792 = vrot.lane.b32.xlu0 %v1790, 32
  %v1793 = vpop.permute.xlu0 %1792
  %v1795 = vmul.f32 %v1777, %v1793
  %s1796 = scalar_lea.vmem [#allocation2], 120
  %v1797 = vld [vmem:[%s1796] sm:$0xff]
  %1799 = vrot.lane.b32.xlu0 %v1795, 64
  %v1800 = vpop.permute.xlu0 %1799
  %v1801 = vsel %vm269, %v1800, 0
  %1803 = vmatprep.subr.mxu0 0.0
  %1804 = vmatpush1.msra.mxu0 %v265
  %1805 = vmatprep.subr.mxu0 0.0
  %1806 = vmatpush1.msra.mxu0 %v266
  %1807 = vmatprep.subr.mxu0 0.0
  %1808 = vmatpush1.msra.mxu0 %v267
  %1809 = vmatprep.subr.mxu0 0.0
  %1810 = vmatpush1.msra.mxu0 %v268
  %1811 = vmatprep.subr.mxu0 0.0
  %1812 = vmatpush1.msra.mxu0 0.0
  %1813 = vmatprep.subr.mxu0 0.0
  %1814 = vmatpush1.msra.mxu0 0.0
  %1815 = vmatprep.subr.mxu0 0.0
  %1816 = vmatpush1.msra.mxu0 0.0
  %1817 = vmatprep.subr.mxu0 0.0
  %1818 = vmatpush1.msra.mxu0 0.0
  %1819 = vmatprep.subr.mxu0 0.0
  %1820 = vmatpush1.msra.mxu0 0.0
  %1821 = vmatprep.subr.mxu0 0.0
  %1822 = vmatpush1.msra.mxu0 0.0
  %1823 = vmatprep.subr.mxu0 0.0
  %1824 = vmatpush1.msra.mxu0 0.0
  %1825 = vmatprep.subr.mxu0 0.0
  %1826 = vmatpush1.msra.mxu0 0.0
  %1827 = vmatprep.subr.mxu0 0.0
  %1828 = vmatpush1.msra.mxu0 0.0
  %1829 = vmatprep.subr.mxu0 0.0
  %1830 = vmatpush1.msra.mxu0 0.0
  %1831 = vmatprep.subr.mxu0 0.0
  %1832 = vmatpush1.msra.mxu0 0.0
  %1833 = vmatprep.subr.mxu0 0.0
  %1834 = vmatpush1.msra.mxu0 0.0
  %1835 = vmatprep.subr.mxu0 0.0
  %1836 = vmatpush1.msra.mxu0 0.0
  %1837 = vmatprep.subr.mxu0 0.0
  %1838 = vmatpush1.msra.mxu0 0.0
  %1839 = vmatprep.subr.mxu0 0.0
  %1840 = vmatpush1.msra.mxu0 0.0
  %1841 = vmatprep.subr.mxu0 0.0
  %1842 = vmatpush1.msra.mxu0 0.0
  %1843 = vmatprep.subr.mxu0 0.0
  %1844 = vmatpush1.msra.mxu0 0.0
  %1845 = vmatprep.subr.mxu0 0.0
  %1846 = vmatpush1.msra.mxu0 0.0
  %1847 = vmatprep.subr.mxu0 0.0
  %1848 = vmatpush1.msra.mxu0 0.0
  %1849 = vmatprep.subr.mxu0 0.0
  %1850 = vmatpush1.msra.mxu0 0.0
  %1851 = vmatprep.subr.mxu0 0.0
  %1852 = vmatpush1.msra.mxu0 0.0
  %1853 = vmatprep.subr.mxu0 0.0
  %1854 = vmatpush1.msra.mxu0 0.0
  %1855 = vmatprep.subr.mxu0 0.0
  %1856 = vmatpush1.msra.mxu0 0.0
  %1857 = vmatprep.subr.mxu0 0.0
  %1858 = vmatpush1.msra.mxu0 0.0
  %1859 = vmatprep.subr.mxu0 0.0
  %1860 = vmatpush1.msra.mxu0 0.0
  %1861 = vmatprep.subr.mxu0 0.0
  %1862 = vmatpush1.msra.mxu0 0.0
  %1863 = vmatprep.subr.mxu0 0.0
  %1864 = vmatpush1.msra.mxu0 0.0
  %1865 = vmatprep.subr.mxu0 0.0
  %1866 = vmatpush1.msra.mxu0 0.0
  %1867 = vmatprep.mubr.f32.mxu0 0.0
  %1868 = vmatmul.mubr.f32.gmra.mrb[0].mxu0 %v1801
  %v1869 = vpop.f32.mrb[0].mxu0
  %v1870 = vadd.f32 0.0, %v1869
  %v1871 = vpop.f32.mrb[0].mxu0
  %1872 = vdwg.mxu0
  %v1873 = vadd.f32 %v1797, %v1870
  %v1874 = vxor.u32 %v1873, 2147483648
  %v1875 = vmul.f32 %v1874, 1.442695
  %v1876 = vpow.pop %v1875
  %v1877 = vadd.f32 %v1876, 1.0
  %v1878 = vrcp.pop %v1877
  %v1879 = vmul.f32 1.0, %v1878
  %v1880 = vtanh.pop %v1873
  %v1881 = vmul.f32 %v1879, %v1789
  %1883 = vrot.lane.b32.xlu0 %v1880, 32
  %v1884 = vpop.permute.xlu0 %1883
  %v1886 = vmul.f32 %v1879, %v1884
  %1888 = vrot.lane.b32.xlu0 %v1886, 32
  %v1889 = vpop.permute.xlu0 %1888
  %v1891 = vadd.f32 %v1881, %v1889
  %v1892 = vtanh.pop %v1891
  %1894 = vrot.lane.b32.xlu0 %v1892, 32
  %v1895 = vpop.permute.xlu0 %1894
  %v1897 = vmul.f32 %v1879, %v1895
  %v1898 = vld [vmem:[%s4] sm:$0xff]
  %v1899 = vld [vmem:[%s4 + $0x8] sm:$0xff]
  %v1900 = vld [vmem:[%s4 + $0x10] sm:$0xff]
  %v1901 = vld [vmem:[%s4 + $0x18] sm:$0xff]
  %v1902 = vld [vmem:[%s5] sm:$0x1]
  %v1904 = vlaneseq
  %v1905 = vshrl.u32 %v1904, 7
  %v1906 = vsub.s32 0, %v1905
  %v1907 = vrot.slane %v1902, %v1906
  %1910 = vrot.lane.b32.xlu0 %v1897, 64
  %v1911 = vpop.permute.xlu0 %1910
  %v1912 = vsel %vm269, %v1911, 0
  %1914 = vmatprep.subr.mxu0 0.0
  %1915 = vmatpush1.msra.mxu0 %v1898
  %1916 = vmatprep.subr.mxu0 0.0
  %1917 = vmatpush1.msra.mxu0 %v1899
  %1918 = vmatprep.subr.mxu0 0.0
  %1919 = vmatpush1.msra.mxu0 %v1900
  %1920 = vmatprep.subr.mxu0 0.0
  %1921 = vmatpush1.msra.mxu0 %v1901
  %1922 = vmatprep.subr.mxu0 0.0
  %1923 = vmatpush1.msra.mxu0 0.0
  %1924 = vmatprep.subr.mxu0 0.0
  %1925 = vmatpush1.msra.mxu0 0.0
  %1926 = vmatprep.subr.mxu0 0.0
  %1927 = vmatpush1.msra.mxu0 0.0
  %1928 = vmatprep.subr.mxu0 0.0
  %1929 = vmatpush1.msra.mxu0 0.0
  %1930 = vmatprep.subr.mxu0 0.0
  %1931 = vmatpush1.msra.mxu0 0.0
  %1932 = vmatprep.subr.mxu0 0.0
  %1933 = vmatpush1.msra.mxu0 0.0
  %1934 = vmatprep.subr.mxu0 0.0
  %1935 = vmatpush1.msra.mxu0 0.0
  %1936 = vmatprep.subr.mxu0 0.0
  %1937 = vmatpush1.msra.mxu0 0.0
  %1938 = vmatprep.subr.mxu0 0.0
  %1939 = vmatpush1.msra.mxu0 0.0
  %1940 = vmatprep.subr.mxu0 0.0
  %1941 = vmatpush1.msra.mxu0 0.0
  %1942 = vmatprep.subr.mxu0 0.0
  %1943 = vmatpush1.msra.mxu0 0.0
  %1944 = vmatprep.subr.mxu0 0.0
  %1945 = vmatpush1.msra.mxu0 0.0
  %1946 = vmatprep.subr.mxu0 0.0
  %1947 = vmatpush1.msra.mxu0 0.0
  %1948 = vmatprep.subr.mxu0 0.0
  %1949 = vmatpush1.msra.mxu0 0.0
  %1950 = vmatprep.subr.mxu0 0.0
  %1951 = vmatpush1.msra.mxu0 0.0
  %1952 = vmatprep.subr.mxu0 0.0
  %1953 = vmatpush1.msra.mxu0 0.0
  %1954 = vmatprep.subr.mxu0 0.0
  %1955 = vmatpush1.msra.mxu0 0.0
  %1956 = vmatprep.subr.mxu0 0.0
  %1957 = vmatpush1.msra.mxu0 0.0
  %1958 = vmatprep.subr.mxu0 0.0
  %1959 = vmatpush1.msra.mxu0 0.0
  %1960 = vmatprep.subr.mxu0 0.0
  %1961 = vmatpush1.msra.mxu0 0.0
  %1962 = vmatprep.subr.mxu0 0.0
  %1963 = vmatpush1.msra.mxu0 0.0
  %1964 = vmatprep.subr.mxu0 0.0
  %1965 = vmatpush1.msra.mxu0 0.0
  %1966 = vmatprep.subr.mxu0 0.0
  %1967 = vmatpush1.msra.mxu0 0.0
  %1968 = vmatprep.subr.mxu0 0.0
  %1969 = vmatpush1.msra.mxu0 0.0
  %1970 = vmatprep.subr.mxu0 0.0
  %1971 = vmatpush1.msra.mxu0 0.0
  %1972 = vmatprep.subr.mxu0 0.0
  %1973 = vmatpush1.msra.mxu0 0.0
  %1974 = vmatprep.subr.mxu0 0.0
  %1975 = vmatpush1.msra.mxu0 0.0
  %1976 = vmatprep.subr.mxu0 0.0
  %1977 = vmatpush1.msra.mxu0 0.0
  %1978 = vmatprep.mubr.f32.mxu0 0.0
  %1979 = vmatmul.mubr.f32.gmra.mrb[0].mxu0 %v1912
  %v1980 = vpop.f32.mrb[0].mxu0
  %v1981 = vadd.f32 %v1907, %v1980
  %v1982 = vpop.f32.mrb[0].mxu0
  %1983 = vdwg.mxu0
  %1984 = vst [vmem:[%s6] sm:$0xff] %v1981
  // Predicated region
  $region26: #{lstm_agent_forward.1} parent=0 // pred_check
    _
  $region27: #{lstm_agent_forward.1} parent=0 // pred_check_branch
    %1986 = sbr.rel (0) target = $region29
  $region28: #{lstm_agent_forward.1} parent=0 // pred_region
    _
  $region29: #{lstm_agent_forward.1} parent=0 // pred_fallthru
    _
  // Predicated region
  $region30: #{lstm_agent_forward.1} parent=0 // pred_check
    _
  $region31: #{lstm_agent_forward.1} parent=0 // pred_check_branch
    %1988 = sbr.rel (0) target = $region33
  $region32: #{lstm_agent_forward.1} parent=0 // pred_region
    _
  $region33: #{lstm_agent_forward.1} parent=0 // pred_fallthru
    _

</llo_original>
